<compile_context>
chip_gen: v7x
topology: tpu7x:2x2x1
jax: 0.10.0
libtpu: 0.0.40
codegen_flags: <defaults>
</compile_context>

<pallas_src>
import functools

import jax
import jax.numpy as jnp
from jax.experimental import pallas as pl
from jax.experimental.pallas import tpu as pltpu


# --------------------------------------------------------------------------
# Fused kernel: one batch element per grid step.
#
# Layout: "flat-padded" channel-major.  Activations are (C, L) with flat column
# p = i*W + j holding pixel (i, j); columns with j >= valid-width are don't-care
# garbage that is never read by downstream valid pixels (VALID conv shrinks the
# valid width by 2 each time while the row stride stays W).
# --------------------------------------------------------------------------
def _decoder_block_kernel(x_ref, w1_ref, s1_ref, w2_ref, s2_ref, wu_ref, bu_ref,
                          o_ref, *, H, W):
    Cin = w1_ref.shape[1] // 9
    C2 = w1_ref.shape[0]
    Cu = wu_ref.shape[0] // 4
    Ho1, Wo1 = H - 2, W - 2
    Ho2, Wo2 = H - 4, W - 4
    L1 = (Ho1 - 1) * W + Wo1          # flat-padded length after conv1
    L2 = (Ho2 - 1) * W + Wo2          # flat-padded length after conv2

    x = x_ref[...]                    # (Cin, H*W)

    # ---- conv1 + folded BN + ReLU: single im2col GEMM (C2, 9*Cin) @ (9*Cin, L1)
    p1 = jnp.concatenate(
        [x[:, kh * W + kw: kh * W + kw + L1]
         for kh in range(3) for kw in range(3)], axis=0)
    h1 = jnp.maximum(
        jnp.dot(w1_ref[...], p1, preferred_element_type=jnp.float32) + s1_ref[...],
        0.0)                          # (C2, L1)

    # ---- conv2 + folded BN + ReLU: single GEMM (C2, 9*C2) @ (9*C2, L2)
    p2 = jnp.concatenate(
        [h1[:, kh * W + kw: kh * W + kw + L2]
         for kh in range(3) for kw in range(3)], axis=0)
    h2 = jnp.maximum(
        jnp.dot(w2_ref[...], p2, preferred_element_type=jnp.float32) + s2_ref[...],
        0.0)                          # (C2, L2)

    # ---- ConvTranspose2d(k=2, s=2): all 4 taps in one GEMM.
    # t[(kh*2+kw)*Cu + co, i*W + j] = out[co, 2i+kh, 2j+kw]
    t = jnp.dot(wu_ref[...], h2, preferred_element_type=jnp.float32) + bu_ref[...]

    # ---- 2x2 spatial interleave, done in-kernel (no XLA glue pass).
    # Width interleave via constant 0/1 scatter matrices: r = a @ e0 + b @ e1
    # places a[j] at lane 2j and b[j] at lane 2j+1.
    jj = jax.lax.broadcasted_iota(jnp.int32, (Wo2, 2 * Wo2), 0)
    uu = jax.lax.broadcasted_iota(jnp.int32, (Wo2, 2 * Wo2), 1)
    e0 = (uu == 2 * jj).astype(jnp.float32)
    e1 = (uu == 2 * jj + 1).astype(jnp.float32)

    z = []
    for kh in range(2):
        a = jnp.concatenate(                              # kw = 0 tap, row-separated
            [t[(2 * kh) * Cu:(2 * kh + 1) * Cu, i * W: i * W + Wo2]
             for i in range(Ho2)], axis=0)                # (Ho2*Cu, Wo2)
        b = jnp.concatenate(                              # kw = 1 tap
            [t[(2 * kh + 1) * Cu:(2 * kh + 2) * Cu, i * W: i * W + Wo2]
             for i in range(Ho2)], axis=0)
        z.append(jnp.dot(a, e0, preferred_element_type=jnp.float32)
                 + jnp.dot(b, e1, preferred_element_type=jnp.float32))  # (Ho2*Cu, 2*Wo2)

    # Height interleave via the store pattern: output is flat (Cu, (2*Ho2)*(2*Wo2)),
    # rows 2i (kh=0) and 2i+1 (kh=1) are contiguous -> one store per input row i.
    # TODO(synk): for large H, move this row loop onto a grid axis.
    for i in range(Ho2):
        chunk = jnp.concatenate(
            [z[0][i * Cu:(i + 1) * Cu, :], z[1][i * Cu:(i + 1) * Cu, :]], axis=1)
        o_ref[:, i * 4 * Wo2:(i + 1) * 4 * Wo2] = chunk.astype(o_ref.dtype)


# --------------------------------------------------------------------------
# Parameter folding (trace-time): BN scale into weights, conv bias into shift.
# --------------------------------------------------------------------------
def _fold_params(params, norm, eps=1e-5):
    gamma, beta = params["bn_gamma"], params["bn_beta"]
    mean, var = params["bn_mean"], params["bn_var"]
    if norm:
        s = gamma / jnp.sqrt(var + eps)
        shift_bn = beta - mean * s
    else:
        s = jnp.ones_like(gamma)
        shift_bn = jnp.zeros_like(beta)

    cin = params["conv1_w"].shape[2]
    c2 = params["conv1_w"].shape[3]
    cu = params["up_w"].shape[3]

    # conv weights are HWIO (3,3,Cin,Cout); tap-major row index = (kh*3+kw)*Cin+ci.
    w1f = (params["conv1_w"] * s).reshape(9 * cin, c2).T        # (C2, 9*Cin)
    w2f = (params["conv2_w"] * s).reshape(9 * c2, c2).T         # (C2, 9*C2)
    s1 = (params["conv1_b"] * s + shift_bn).reshape(c2, 1)
    s2 = (params["conv2_b"] * s + shift_bn).reshape(c2, 1)

    # upconv (2,2,C2,Cu) -> stacked taps (4*Cu, C2), row index = (kh*2+kw)*Cu + co.
    wu = jnp.transpose(params["up_w"], (0, 1, 3, 2)).reshape(4 * cu, c2)
    bu = jnp.tile(params["up_b"], 4).reshape(4 * cu, 1)
    return w1f, s1, w2f, s2, wu, bu


@functools.partial(jax.jit, static_argnames=("norm",))
def decoder_block_2d(x_nchw, params, norm=True):
    """Pallas implementation of DecoderBlock2d.forward. x_nchw: (N, dim1, H, W)."""
    N, Cin, H, W = x_nchw.shape
    w1f, s1, w2f, s2, wu, bu = _fold_params(params, norm)
    C2 = w1f.shape[0]
    Cu = wu.shape[0] // 4
    Ho2, Wo2 = H - 4, W - 4

    x_flat = x_nchw.reshape(N, Cin, H * W).astype(jnp.float32)   # free reshape

    out_flat = pl.pallas_call(
        functools.partial(_decoder_block_kernel, H=H, W=W),
        out_shape=jax.ShapeDtypeStruct((N, Cu, 4 * Ho2 * Wo2), jnp.float32),
        grid=(N,),
        in_specs=[
            pl.BlockSpec((None, Cin, H * W), lambda n: (n, 0, 0)),
            pl.BlockSpec((C2, 9 * Cin), lambda n: (0, 0)),
            pl.BlockSpec((C2, 1), lambda n: (0, 0)),
            pl.BlockSpec((C2, 9 * C2), lambda n: (0, 0)),
            pl.BlockSpec((C2, 1), lambda n: (0, 0)),
            pl.BlockSpec((4 * Cu, C2), lambda n: (0, 0)),
            pl.BlockSpec((4 * Cu, 1), lambda n: (0, 0)),
        ],
        out_specs=pl.BlockSpec((None, Cu, 4 * Ho2 * Wo2), lambda n: (n, 0, 0)),
        compiler_params=pltpu.CompilerParams(dimension_semantics=("parallel",)),
    )(x_flat, w1f, s1, w2f, s2, wu, bu)

    # Free reshape; result is already NCHW (channel-major throughout).
    return out_flat.reshape(N, Cu, 2 * Ho2, 2 * Wo2)


# --------------------------------------------------------------------------
# Parameter init + pure-JAX reference (correctness check)
# --------------------------------------------------------------------------
def init_params(key, dim1, dim2):
    ks = jax.random.split(key, 10)
    s = 0.1
    return {
        "conv1_w": s * jax.random.normal(ks[0], (3, 3, dim1, dim2), jnp.float32),
        "conv1_b": s * jax.random.normal(ks[1], (dim2,), jnp.float32),
        "conv2_w": s * jax.random.normal(ks[2], (3, 3, dim2, dim2), jnp.float32),
        "conv2_b": s * jax.random.normal(ks[3], (dim2,), jnp.float32),
        "bn_gamma": 1.0 + s * jax.random.normal(ks[4], (dim2,), jnp.float32),
        "bn_beta": s * jax.random.normal(ks[5], (dim2,), jnp.float32),
        "bn_mean": s * jax.random.normal(ks[6], (dim2,), jnp.float32),
        "bn_var": jnp.abs(1.0 + s * jax.random.normal(ks[7], (dim2,), jnp.float32)),
        "up_w": s * jax.random.normal(ks[8], (2, 2, dim2, dim2 // 2), jnp.float32),
        "up_b": s * jax.random.normal(ks[9], (dim2 // 2,), jnp.float32),
    }


def reference_forward(x_nchw, p, norm=True, eps=1e-5):
    if norm:
        s = p["bn_gamma"] / jnp.sqrt(p["bn_var"] + eps)
        shift = p["bn_beta"] - p["bn_mean"] * s
    else:
        s = jnp.ones_like(p["bn_gamma"])
        shift = jnp.zeros_like(p["bn_beta"])
    x = jnp.transpose(x_nchw, (0, 2, 3, 1)).astype(jnp.float32)   # NCHW -> NHWC

    def conv(x, w, b):
        y = jax.lax.conv_general_dilated(
            x, w, window_strides=(1, 1), padding="VALID",
            dimension_numbers=("NHWC", "HWIO", "NHWC"))
        return y + b

    h = jnp.maximum(conv(x, p["conv1_w"], p["conv1_b"]) * s + shift, 0.0)
    h = jnp.maximum(conv(h, p["conv2_w"], p["conv2_b"]) * s + shift, 0.0)

    N, Hi, Wi, _ = h.shape
    Cout = p["up_w"].shape[-1]
    y6 = jnp.einsum("nijc,hwcd->nihjwd", h, p["up_w"])
    y = y6.reshape(N, 2 * Hi, 2 * Wi, Cout) + p["up_b"]
    return jnp.transpose(y, (0, 3, 1, 2))                          # NHWC -> NCHW


if __name__ == "__main__":
    key = jax.random.PRNGKey(0)
    kx, kp = jax.random.split(key)

    dim1, dim2 = 4, 8          # DecoderBlock2d(dim1=4, dim2=8, activation=ReLU, norm=True)
    N, H, W = 2, 16, 16
    x = jax.random.normal(kx, (N, dim1, H, W), jnp.float32)        # NCHW, like PyTorch
    params = init_params(kp, dim1, dim2)

    out = decoder_block_2d(x, params, norm=True)
    out = jax.block_until_ready(out)

    ref = reference_forward(x, params, norm=True)
    assert out.shape == (N, dim2 // 2, 2 * (H - 4), 2 * (W - 4)), out.shape  # (2, 4, 24, 24)
    err = float(jnp.max(jnp.abs(out - ref)))
    assert jnp.allclose(out, ref, atol=1e-4, rtol=1e-3), err

    print("KERNEL_OK")
</pallas_src>

<mosaic_0001>
module attributes {stable_mosaic.version = 11 : i64} {
  func.func @_decoder_block_kernel(%arg0: i32, %arg1: memref<1x4x256xf32, #tpu.memory_space<vmem>>, %arg2: memref<8x36xf32, #tpu.memory_space<vmem>>, %arg3: memref<8x1xf32, #tpu.memory_space<vmem>>, %arg4: memref<8x72xf32, #tpu.memory_space<vmem>>, %arg5: memref<8x1xf32, #tpu.memory_space<vmem>>, %arg6: memref<16x8xf32, #tpu.memory_space<vmem>>, %arg7: memref<16x1xf32, #tpu.memory_space<vmem>>, %arg8: memref<1x4x576xf32, #tpu.memory_space<vmem>>) attributes {dimension_semantics = [#tpu.dimension_semantics<parallel>], iteration_bounds = array<i64: 2>, scalar_prefetch = 0 : i64, scratch_operands = 0 : i64, tpu.core_type = #tpu.core_type<tc>, window_params = [{transform_indices = @transform_0, window_bounds = array<i64: 1, 4, 256>}, {pipeline_mode = #tpu.pipeline_mode<synchronous>, transform_indices = @transform_1, window_bounds = array<i64: 8, 36>}, {pipeline_mode = #tpu.pipeline_mode<synchronous>, transform_indices = @transform_2, window_bounds = array<i64: 8, 1>}, {pipeline_mode = #tpu.pipeline_mode<synchronous>, transform_indices = @transform_3, window_bounds = array<i64: 8, 72>}, {pipeline_mode = #tpu.pipeline_mode<synchronous>, transform_indices = @transform_4, window_bounds = array<i64: 8, 1>}, {pipeline_mode = #tpu.pipeline_mode<synchronous>, transform_indices = @transform_5, window_bounds = array<i64: 16, 8>}, {pipeline_mode = #tpu.pipeline_mode<synchronous>, transform_indices = @transform_6, window_bounds = array<i64: 16, 1>}, {transform_indices = @transform_7, window_bounds = array<i64: 1, 4, 576>}]} {
    %c0 = arith.constant 0 : index
    %c0_0 = arith.constant 0 : index
    %c0_1 = arith.constant 0 : index
    %0 = vector.load %arg1[%c0, %c0_0, %c0_1] : memref<1x4x256xf32, #tpu.memory_space<vmem>>, vector<1x4x256xf32>
    %1 = vector.shape_cast %0 : vector<1x4x256xf32> to vector<4x256xf32>
    %2 = vector.extract_strided_slice %1 {offsets = [0, 0], sizes = [4, 222], strides = [1, 1]} : vector<4x256xf32> to vector<4x222xf32>
    %3 = vector.extract_strided_slice %1 {offsets = [0, 1], sizes = [4, 222], strides = [1, 1]} : vector<4x256xf32> to vector<4x222xf32>
    %4 = vector.extract_strided_slice %1 {offsets = [0, 2], sizes = [4, 222], strides = [1, 1]} : vector<4x256xf32> to vector<4x222xf32>
    %5 = vector.extract_strided_slice %1 {offsets = [0, 16], sizes = [4, 222], strides = [1, 1]} : vector<4x256xf32> to vector<4x222xf32>
    %6 = vector.extract_strided_slice %1 {offsets = [0, 17], sizes = [4, 222], strides = [1, 1]} : vector<4x256xf32> to vector<4x222xf32>
    %7 = vector.extract_strided_slice %1 {offsets = [0, 18], sizes = [4, 222], strides = [1, 1]} : vector<4x256xf32> to vector<4x222xf32>
    %8 = vector.extract_strided_slice %1 {offsets = [0, 32], sizes = [4, 222], strides = [1, 1]} : vector<4x256xf32> to vector<4x222xf32>
    %9 = vector.extract_strided_slice %1 {offsets = [0, 33], sizes = [4, 222], strides = [1, 1]} : vector<4x256xf32> to vector<4x222xf32>
    %10 = vector.extract_strided_slice %1 {offsets = [0, 34], sizes = [4, 222], strides = [1, 1]} : vector<4x256xf32> to vector<4x222xf32>
    %11 = tpu.concatenate %2, %3, %4, %5, %6, %7, %8, %9, %10 in 0 : vector<4x222xf32>, vector<4x222xf32>, vector<4x222xf32>, vector<4x222xf32>, vector<4x222xf32>, vector<4x222xf32>, vector<4x222xf32>, vector<4x222xf32>, vector<4x222xf32> -> vector<36x222xf32>
    %c0_2 = arith.constant 0 : index
    %c0_3 = arith.constant 0 : index
    %12 = vector.load %arg2[%c0_2, %c0_3] : memref<8x36xf32, #tpu.memory_space<vmem>>, vector<8x36xf32>
    %cst = arith.constant dense<0.000000e+00> : vector<8x222xf32>
    %13 = tpu.matmul %12, %11, %cst {dimension_numbers = #tpu.dot_dimension_numbers<[1], [0], [0], [1], [0, 0, 1, 1], [], []>} : vector<8x36xf32>, vector<36x222xf32>, vector<8x222xf32> -> vector<8x222xf32>
    %c0_4 = arith.constant 0 : index
    %c0_5 = arith.constant 0 : index
    %14 = vector.load %arg3[%c0_4, %c0_5] : memref<8x1xf32, #tpu.memory_space<vmem>>, vector<8x1xf32>
    %15 = vector.broadcast %14 : vector<8x1xf32> to vector<8x222xf32>
    %16 = arith.addf %13, %15 : vector<8x222xf32>
    %cst_6 = arith.constant 0.000000e+00 : f32
    %17 = vector.broadcast %cst_6 : f32 to vector<8x222xf32>
    %18 = arith.maximumf %16, %17 : vector<8x222xf32>
    %19 = vector.extract_strided_slice %18 {offsets = [0, 0], sizes = [8, 188], strides = [1, 1]} : vector<8x222xf32> to vector<8x188xf32>
    %20 = vector.extract_strided_slice %18 {offsets = [0, 1], sizes = [8, 188], strides = [1, 1]} : vector<8x222xf32> to vector<8x188xf32>
    %21 = vector.extract_strided_slice %18 {offsets = [0, 2], sizes = [8, 188], strides = [1, 1]} : vector<8x222xf32> to vector<8x188xf32>
    %22 = vector.extract_strided_slice %18 {offsets = [0, 16], sizes = [8, 188], strides = [1, 1]} : vector<8x222xf32> to vector<8x188xf32>
    %23 = vector.extract_strided_slice %18 {offsets = [0, 17], sizes = [8, 188], strides = [1, 1]} : vector<8x222xf32> to vector<8x188xf32>
    %24 = vector.extract_strided_slice %18 {offsets = [0, 18], sizes = [8, 188], strides = [1, 1]} : vector<8x222xf32> to vector<8x188xf32>
    %25 = vector.extract_strided_slice %18 {offsets = [0, 32], sizes = [8, 188], strides = [1, 1]} : vector<8x222xf32> to vector<8x188xf32>
    %26 = vector.extract_strided_slice %18 {offsets = [0, 33], sizes = [8, 188], strides = [1, 1]} : vector<8x222xf32> to vector<8x188xf32>
    %27 = vector.extract_strided_slice %18 {offsets = [0, 34], sizes = [8, 188], strides = [1, 1]} : vector<8x222xf32> to vector<8x188xf32>
    %28 = tpu.concatenate %19, %20, %21, %22, %23, %24, %25, %26, %27 in 0 : vector<8x188xf32>, vector<8x188xf32>, vector<8x188xf32>, vector<8x188xf32>, vector<8x188xf32>, vector<8x188xf32>, vector<8x188xf32>, vector<8x188xf32>, vector<8x188xf32> -> vector<72x188xf32>
    %c0_7 = arith.constant 0 : index
    %c0_8 = arith.constant 0 : index
    %29 = vector.load %arg4[%c0_7, %c0_8] : memref<8x72xf32, #tpu.memory_space<vmem>>, vector<8x72xf32>
    %cst_9 = arith.constant dense<0.000000e+00> : vector<8x188xf32>
    %30 = tpu.matmul %29, %28, %cst_9 {dimension_numbers = #tpu.dot_dimension_numbers<[1], [0], [0], [1], [0, 0, 1, 1], [], []>} : vector<8x72xf32>, vector<72x188xf32>, vector<8x188xf32> -> vector<8x188xf32>
    %c0_10 = arith.constant 0 : index
    %c0_11 = arith.constant 0 : index
    %31 = vector.load %arg5[%c0_10, %c0_11] : memref<8x1xf32, #tpu.memory_space<vmem>>, vector<8x1xf32>
    %32 = vector.broadcast %31 : vector<8x1xf32> to vector<8x188xf32>
    %33 = arith.addf %30, %32 : vector<8x188xf32>
    %cst_12 = arith.constant 0.000000e+00 : f32
    %34 = vector.broadcast %cst_12 : f32 to vector<8x188xf32>
    %35 = arith.maximumf %33, %34 : vector<8x188xf32>
    %c0_13 = arith.constant 0 : index
    %c0_14 = arith.constant 0 : index
    %36 = vector.load %arg6[%c0_13, %c0_14] : memref<16x8xf32, #tpu.memory_space<vmem>>, vector<16x8xf32>
    %cst_15 = arith.constant dense<0.000000e+00> : vector<16x188xf32>
    %37 = tpu.matmul %36, %35, %cst_15 {dimension_numbers = #tpu.dot_dimension_numbers<[1], [0], [0], [1], [0, 0, 1, 1], [], []>} : vector<16x8xf32>, vector<8x188xf32>, vector<16x188xf32> -> vector<16x188xf32>
    %c0_16 = arith.constant 0 : index
    %c0_17 = arith.constant 0 : index
    %38 = vector.load %arg7[%c0_16, %c0_17] : memref<16x1xf32, #tpu.memory_space<vmem>>, vector<16x1xf32>
    %39 = vector.broadcast %38 : vector<16x1xf32> to vector<16x188xf32>
    %40 = arith.addf %37, %39 : vector<16x188xf32>
    %41 = tpu.iota {dimensions = array<i32: 0>} : vector<12x24xi32>
    %42 = tpu.iota {dimensions = array<i32: 1>} : vector<12x24xi32>
    %c2_i32 = arith.constant 2 : i32
    %43 = vector.broadcast %c2_i32 : i32 to vector<12x24xi32>
    %44 = arith.muli %43, %41 : vector<12x24xi32>
    %45 = arith.cmpi eq, %42, %44 : vector<12x24xi32>
    %46 = arith.extui %45 : vector<12x24xi1> to vector<12x24xi32>
    %47 = arith.sitofp %46 : vector<12x24xi32> to vector<12x24xf32>
    %c2_i32_18 = arith.constant 2 : i32
    %48 = vector.broadcast %c2_i32_18 : i32 to vector<12x24xi32>
    %49 = arith.muli %48, %41 : vector<12x24xi32>
    %c1_i32 = arith.constant 1 : i32
    %50 = vector.broadcast %c1_i32 : i32 to vector<12x24xi32>
    %51 = arith.addi %49, %50 : vector<12x24xi32>
    %52 = arith.cmpi eq, %42, %51 : vector<12x24xi32>
    %53 = arith.extui %52 : vector<12x24xi1> to vector<12x24xi32>
    %54 = arith.sitofp %53 : vector<12x24xi32> to vector<12x24xf32>
    %55 = vector.extract_strided_slice %40 {offsets = [0, 0], sizes = [4, 12], strides = [1, 1]} : vector<16x188xf32> to vector<4x12xf32>
    %56 = vector.extract_strided_slice %40 {offsets = [0, 16], sizes = [4, 12], strides = [1, 1]} : vector<16x188xf32> to vector<4x12xf32>
    %57 = vector.extract_strided_slice %40 {offsets = [0, 32], sizes = [4, 12], strides = [1, 1]} : vector<16x188xf32> to vector<4x12xf32>
    %58 = vector.extract_strided_slice %40 {offsets = [0, 48], sizes = [4, 12], strides = [1, 1]} : vector<16x188xf32> to vector<4x12xf32>
    %59 = vector.extract_strided_slice %40 {offsets = [0, 64], sizes = [4, 12], strides = [1, 1]} : vector<16x188xf32> to vector<4x12xf32>
    %60 = vector.extract_strided_slice %40 {offsets = [0, 80], sizes = [4, 12], strides = [1, 1]} : vector<16x188xf32> to vector<4x12xf32>
    %61 = vector.extract_strided_slice %40 {offsets = [0, 96], sizes = [4, 12], strides = [1, 1]} : vector<16x188xf32> to vector<4x12xf32>
    %62 = vector.extract_strided_slice %40 {offsets = [0, 112], sizes = [4, 12], strides = [1, 1]} : vector<16x188xf32> to vector<4x12xf32>
    %63 = vector.extract_strided_slice %40 {offsets = [0, 128], sizes = [4, 12], strides = [1, 1]} : vector<16x188xf32> to vector<4x12xf32>
    %64 = vector.extract_strided_slice %40 {offsets = [0, 144], sizes = [4, 12], strides = [1, 1]} : vector<16x188xf32> to vector<4x12xf32>
    %65 = vector.extract_strided_slice %40 {offsets = [0, 160], sizes = [4, 12], strides = [1, 1]} : vector<16x188xf32> to vector<4x12xf32>
    %66 = vector.extract_strided_slice %40 {offsets = [0, 176], sizes = [4, 12], strides = [1, 1]} : vector<16x188xf32> to vector<4x12xf32>
    %67 = tpu.concatenate %55, %56, %57, %58, %59, %60, %61, %62, %63, %64, %65, %66 in 0 : vector<4x12xf32>, vector<4x12xf32>, vector<4x12xf32>, vector<4x12xf32>, vector<4x12xf32>, vector<4x12xf32>, vector<4x12xf32>, vector<4x12xf32>, vector<4x12xf32>, vector<4x12xf32>, vector<4x12xf32>, vector<4x12xf32> -> vector<48x12xf32>
    %68 = vector.extract_strided_slice %40 {offsets = [4, 0], sizes = [4, 12], strides = [1, 1]} : vector<16x188xf32> to vector<4x12xf32>
    %69 = vector.extract_strided_slice %40 {offsets = [4, 16], sizes = [4, 12], strides = [1, 1]} : vector<16x188xf32> to vector<4x12xf32>
    %70 = vector.extract_strided_slice %40 {offsets = [4, 32], sizes = [4, 12], strides = [1, 1]} : vector<16x188xf32> to vector<4x12xf32>
    %71 = vector.extract_strided_slice %40 {offsets = [4, 48], sizes = [4, 12], strides = [1, 1]} : vector<16x188xf32> to vector<4x12xf32>
    %72 = vector.extract_strided_slice %40 {offsets = [4, 64], sizes = [4, 12], strides = [1, 1]} : vector<16x188xf32> to vector<4x12xf32>
    %73 = vector.extract_strided_slice %40 {offsets = [4, 80], sizes = [4, 12], strides = [1, 1]} : vector<16x188xf32> to vector<4x12xf32>
    %74 = vector.extract_strided_slice %40 {offsets = [4, 96], sizes = [4, 12], strides = [1, 1]} : vector<16x188xf32> to vector<4x12xf32>
    %75 = vector.extract_strided_slice %40 {offsets = [4, 112], sizes = [4, 12], strides = [1, 1]} : vector<16x188xf32> to vector<4x12xf32>
    %76 = vector.extract_strided_slice %40 {offsets = [4, 128], sizes = [4, 12], strides = [1, 1]} : vector<16x188xf32> to vector<4x12xf32>
    %77 = vector.extract_strided_slice %40 {offsets = [4, 144], sizes = [4, 12], strides = [1, 1]} : vector<16x188xf32> to vector<4x12xf32>
    %78 = vector.extract_strided_slice %40 {offsets = [4, 160], sizes = [4, 12], strides = [1, 1]} : vector<16x188xf32> to vector<4x12xf32>
    %79 = vector.extract_strided_slice %40 {offsets = [4, 176], sizes = [4, 12], strides = [1, 1]} : vector<16x188xf32> to vector<4x12xf32>
    %80 = tpu.concatenate %68, %69, %70, %71, %72, %73, %74, %75, %76, %77, %78, %79 in 0 : vector<4x12xf32>, vector<4x12xf32>, vector<4x12xf32>, vector<4x12xf32>, vector<4x12xf32>, vector<4x12xf32>, vector<4x12xf32>, vector<4x12xf32>, vector<4x12xf32>, vector<4x12xf32>, vector<4x12xf32>, vector<4x12xf32> -> vector<48x12xf32>
    %cst_19 = arith.constant dense<0.000000e+00> : vector<48x24xf32>
    %81 = tpu.matmul %67, %47, %cst_19 {dimension_numbers = #tpu.dot_dimension_numbers<[1], [0], [0], [1], [0, 0, 1, 1], [], []>} : vector<48x12xf32>, vector<12x24xf32>, vector<48x24xf32> -> vector<48x24xf32>
    %cst_20 = arith.constant dense<0.000000e+00> : vector<48x24xf32>
    %82 = tpu.matmul %80, %54, %cst_20 {dimension_numbers = #tpu.dot_dimension_numbers<[1], [0], [0], [1], [0, 0, 1, 1], [], []>} : vector<48x12xf32>, vector<12x24xf32>, vector<48x24xf32> -> vector<48x24xf32>
    %83 = arith.addf %81, %82 : vector<48x24xf32>
    %84 = vector.extract_strided_slice %40 {offsets = [8, 0], sizes = [4, 12], strides = [1, 1]} : vector<16x188xf32> to vector<4x12xf32>
    %85 = vector.extract_strided_slice %40 {offsets = [8, 16], sizes = [4, 12], strides = [1, 1]} : vector<16x188xf32> to vector<4x12xf32>
    %86 = vector.extract_strided_slice %40 {offsets = [8, 32], sizes = [4, 12], strides = [1, 1]} : vector<16x188xf32> to vector<4x12xf32>
    %87 = vector.extract_strided_slice %40 {offsets = [8, 48], sizes = [4, 12], strides = [1, 1]} : vector<16x188xf32> to vector<4x12xf32>
    %88 = vector.extract_strided_slice %40 {offsets = [8, 64], sizes = [4, 12], strides = [1, 1]} : vector<16x188xf32> to vector<4x12xf32>
    %89 = vector.extract_strided_slice %40 {offsets = [8, 80], sizes = [4, 12], strides = [1, 1]} : vector<16x188xf32> to vector<4x12xf32>
    %90 = vector.extract_strided_slice %40 {offsets = [8, 96], sizes = [4, 12], strides = [1, 1]} : vector<16x188xf32> to vector<4x12xf32>
    %91 = vector.extract_strided_slice %40 {offsets = [8, 112], sizes = [4, 12], strides = [1, 1]} : vector<16x188xf32> to vector<4x12xf32>
    %92 = vector.extract_strided_slice %40 {offsets = [8, 128], sizes = [4, 12], strides = [1, 1]} : vector<16x188xf32> to vector<4x12xf32>
    %93 = vector.extract_strided_slice %40 {offsets = [8, 144], sizes = [4, 12], strides = [1, 1]} : vector<16x188xf32> to vector<4x12xf32>
    %94 = vector.extract_strided_slice %40 {offsets = [8, 160], sizes = [4, 12], strides = [1, 1]} : vector<16x188xf32> to vector<4x12xf32>
    %95 = vector.extract_strided_slice %40 {offsets = [8, 176], sizes = [4, 12], strides = [1, 1]} : vector<16x188xf32> to vector<4x12xf32>
    %96 = tpu.concatenate %84, %85, %86, %87, %88, %89, %90, %91, %92, %93, %94, %95 in 0 : vector<4x12xf32>, vector<4x12xf32>, vector<4x12xf32>, vector<4x12xf32>, vector<4x12xf32>, vector<4x12xf32>, vector<4x12xf32>, vector<4x12xf32>, vector<4x12xf32>, vector<4x12xf32>, vector<4x12xf32>, vector<4x12xf32> -> vector<48x12xf32>
    %97 = vector.extract_strided_slice %40 {offsets = [12, 0], sizes = [4, 12], strides = [1, 1]} : vector<16x188xf32> to vector<4x12xf32>
    %98 = vector.extract_strided_slice %40 {offsets = [12, 16], sizes = [4, 12], strides = [1, 1]} : vector<16x188xf32> to vector<4x12xf32>
    %99 = vector.extract_strided_slice %40 {offsets = [12, 32], sizes = [4, 12], strides = [1, 1]} : vector<16x188xf32> to vector<4x12xf32>
    %100 = vector.extract_strided_slice %40 {offsets = [12, 48], sizes = [4, 12], strides = [1, 1]} : vector<16x188xf32> to vector<4x12xf32>
    %101 = vector.extract_strided_slice %40 {offsets = [12, 64], sizes = [4, 12], strides = [1, 1]} : vector<16x188xf32> to vector<4x12xf32>
    %102 = vector.extract_strided_slice %40 {offsets = [12, 80], sizes = [4, 12], strides = [1, 1]} : vector<16x188xf32> to vector<4x12xf32>
    %103 = vector.extract_strided_slice %40 {offsets = [12, 96], sizes = [4, 12], strides = [1, 1]} : vector<16x188xf32> to vector<4x12xf32>
    %104 = vector.extract_strided_slice %40 {offsets = [12, 112], sizes = [4, 12], strides = [1, 1]} : vector<16x188xf32> to vector<4x12xf32>
    %105 = vector.extract_strided_slice %40 {offsets = [12, 128], sizes = [4, 12], strides = [1, 1]} : vector<16x188xf32> to vector<4x12xf32>
    %106 = vector.extract_strided_slice %40 {offsets = [12, 144], sizes = [4, 12], strides = [1, 1]} : vector<16x188xf32> to vector<4x12xf32>
    %107 = vector.extract_strided_slice %40 {offsets = [12, 160], sizes = [4, 12], strides = [1, 1]} : vector<16x188xf32> to vector<4x12xf32>
    %108 = vector.extract_strided_slice %40 {offsets = [12, 176], sizes = [4, 12], strides = [1, 1]} : vector<16x188xf32> to vector<4x12xf32>
    %109 = tpu.concatenate %97, %98, %99, %100, %101, %102, %103, %104, %105, %106, %107, %108 in 0 : vector<4x12xf32>, vector<4x12xf32>, vector<4x12xf32>, vector<4x12xf32>, vector<4x12xf32>, vector<4x12xf32>, vector<4x12xf32>, vector<4x12xf32>, vector<4x12xf32>, vector<4x12xf32>, vector<4x12xf32>, vector<4x12xf32> -> vector<48x12xf32>
    %cst_21 = arith.constant dense<0.000000e+00> : vector<48x24xf32>
    %110 = tpu.matmul %96, %47, %cst_21 {dimension_numbers = #tpu.dot_dimension_numbers<[1], [0], [0], [1], [0, 0, 1, 1], [], []>} : vector<48x12xf32>, vector<12x24xf32>, vector<48x24xf32> -> vector<48x24xf32>
    %cst_22 = arith.constant dense<0.000000e+00> : vector<48x24xf32>
    %111 = tpu.matmul %109, %54, %cst_22 {dimension_numbers = #tpu.dot_dimension_numbers<[1], [0], [0], [1], [0, 0, 1, 1], [], []>} : vector<48x12xf32>, vector<12x24xf32>, vector<48x24xf32> -> vector<48x24xf32>
    %112 = arith.addf %110, %111 : vector<48x24xf32>
    %113 = vector.extract_strided_slice %83 {offsets = [0, 0], sizes = [4, 24], strides = [1, 1]} : vector<48x24xf32> to vector<4x24xf32>
    %114 = vector.extract_strided_slice %112 {offsets = [0, 0], sizes = [4, 24], strides = [1, 1]} : vector<48x24xf32> to vector<4x24xf32>
    %115 = tpu.concatenate %113, %114 in 1 : vector<4x24xf32>, vector<4x24xf32> -> vector<4x48xf32>
    %c0_23 = arith.constant 0 : index
    %c0_24 = arith.constant 0 : index
    %c0_25 = arith.constant 0 : index
    %116 = vector.load %arg8[%c0_23, %c0_24, %c0_25] : memref<1x4x576xf32, #tpu.memory_space<vmem>>, vector<1x4x48xf32>
    %117 = vector.shape_cast %116 : vector<1x4x48xf32> to vector<4x48xf32>
    %118 = vector.shape_cast %115 : vector<4x48xf32> to vector<1x4x48xf32>
    tpu.vector_store %arg8[%c0_23, %c0_24, %c0_25], %118 {strides = array<i32>} : memref<1x4x576xf32, #tpu.memory_space<vmem>>, vector<1x4x48xf32>,
    %119 = vector.extract_strided_slice %83 {offsets = [4, 0], sizes = [4, 24], strides = [1, 1]} : vector<48x24xf32> to vector<4x24xf32>
    %120 = vector.extract_strided_slice %112 {offsets = [4, 0], sizes = [4, 24], strides = [1, 1]} : vector<48x24xf32> to vector<4x24xf32>
    %121 = tpu.concatenate %119, %120 in 1 : vector<4x24xf32>, vector<4x24xf32> -> vector<4x48xf32>
    %c0_26 = arith.constant 0 : index
    %c0_27 = arith.constant 0 : index
    %c48 = arith.constant 48 : index
    %122 = vector.load %arg8[%c0_26, %c0_27, %c48] : memref<1x4x576xf32, #tpu.memory_space<vmem>>, vector<1x4x48xf32>
    %123 = vector.shape_cast %122 : vector<1x4x48xf32> to vector<4x48xf32>
    %124 = vector.shape_cast %121 : vector<4x48xf32> to vector<1x4x48xf32>
    tpu.vector_store %arg8[%c0_26, %c0_27, %c48], %124 {strides = array<i32>} : memref<1x4x576xf32, #tpu.memory_space<vmem>>, vector<1x4x48xf32>,
    %125 = vector.extract_strided_slice %83 {offsets = [8, 0], sizes = [4, 24], strides = [1, 1]} : vector<48x24xf32> to vector<4x24xf32>
    %126 = vector.extract_strided_slice %112 {offsets = [8, 0], sizes = [4, 24], strides = [1, 1]} : vector<48x24xf32> to vector<4x24xf32>
    %127 = tpu.concatenate %125, %126 in 1 : vector<4x24xf32>, vector<4x24xf32> -> vector<4x48xf32>
    %c0_28 = arith.constant 0 : index
    %c0_29 = arith.constant 0 : index
    %c96 = arith.constant 96 : index
    %128 = vector.load %arg8[%c0_28, %c0_29, %c96] : memref<1x4x576xf32, #tpu.memory_space<vmem>>, vector<1x4x48xf32>
    %129 = vector.shape_cast %128 : vector<1x4x48xf32> to vector<4x48xf32>
    %130 = vector.shape_cast %127 : vector<4x48xf32> to vector<1x4x48xf32>
    tpu.vector_store %arg8[%c0_28, %c0_29, %c96], %130 {strides = array<i32>} : memref<1x4x576xf32, #tpu.memory_space<vmem>>, vector<1x4x48xf32>,
    %131 = vector.extract_strided_slice %83 {offsets = [12, 0], sizes = [4, 24], strides = [1, 1]} : vector<48x24xf32> to vector<4x24xf32>
    %132 = vector.extract_strided_slice %112 {offsets = [12, 0], sizes = [4, 24], strides = [1, 1]} : vector<48x24xf32> to vector<4x24xf32>
    %133 = tpu.concatenate %131, %132 in 1 : vector<4x24xf32>, vector<4x24xf32> -> vector<4x48xf32>
    %c0_30 = arith.constant 0 : index
    %c0_31 = arith.constant 0 : index
    %c144 = arith.constant 144 : index
    %134 = vector.load %arg8[%c0_30, %c0_31, %c144] : memref<1x4x576xf32, #tpu.memory_space<vmem>>, vector<1x4x48xf32>
    %135 = vector.shape_cast %134 : vector<1x4x48xf32> to vector<4x48xf32>
    %136 = vector.shape_cast %133 : vector<4x48xf32> to vector<1x4x48xf32>
    tpu.vector_store %arg8[%c0_30, %c0_31, %c144], %136 {strides = array<i32>} : memref<1x4x576xf32, #tpu.memory_space<vmem>>, vector<1x4x48xf32>,
    %137 = vector.extract_strided_slice %83 {offsets = [16, 0], sizes = [4, 24], strides = [1, 1]} : vector<48x24xf32> to vector<4x24xf32>
    %138 = vector.extract_strided_slice %112 {offsets = [16, 0], sizes = [4, 24], strides = [1, 1]} : vector<48x24xf32> to vector<4x24xf32>
    %139 = tpu.concatenate %137, %138 in 1 : vector<4x24xf32>, vector<4x24xf32> -> vector<4x48xf32>
    %c0_32 = arith.constant 0 : index
    %c0_33 = arith.constant 0 : index
    %c192 = arith.constant 192 : index
    %140 = vector.load %arg8[%c0_32, %c0_33, %c192] : memref<1x4x576xf32, #tpu.memory_space<vmem>>, vector<1x4x48xf32>
    %141 = vector.shape_cast %140 : vector<1x4x48xf32> to vector<4x48xf32>
    %142 = vector.shape_cast %139 : vector<4x48xf32> to vector<1x4x48xf32>
    tpu.vector_store %arg8[%c0_32, %c0_33, %c192], %142 {strides = array<i32>} : memref<1x4x576xf32, #tpu.memory_space<vmem>>, vector<1x4x48xf32>,
    %143 = vector.extract_strided_slice %83 {offsets = [20, 0], sizes = [4, 24], strides = [1, 1]} : vector<48x24xf32> to vector<4x24xf32>
    %144 = vector.extract_strided_slice %112 {offsets = [20, 0], sizes = [4, 24], strides = [1, 1]} : vector<48x24xf32> to vector<4x24xf32>
    %145 = tpu.concatenate %143, %144 in 1 : vector<4x24xf32>, vector<4x24xf32> -> vector<4x48xf32>
    %c0_34 = arith.constant 0 : index
    %c0_35 = arith.constant 0 : index
    %c240 = arith.constant 240 : index
    %146 = vector.load %arg8[%c0_34, %c0_35, %c240] : memref<1x4x576xf32, #tpu.memory_space<vmem>>, vector<1x4x48xf32>
    %147 = vector.shape_cast %146 : vector<1x4x48xf32> to vector<4x48xf32>
    %148 = vector.shape_cast %145 : vector<4x48xf32> to vector<1x4x48xf32>
    tpu.vector_store %arg8[%c0_34, %c0_35, %c240], %148 {strides = array<i32>} : memref<1x4x576xf32, #tpu.memory_space<vmem>>, vector<1x4x48xf32>,
    %149 = vector.extract_strided_slice %83 {offsets = [24, 0], sizes = [4, 24], strides = [1, 1]} : vector<48x24xf32> to vector<4x24xf32>
    %150 = vector.extract_strided_slice %112 {offsets = [24, 0], sizes = [4, 24], strides = [1, 1]} : vector<48x24xf32> to vector<4x24xf32>
    %151 = tpu.concatenate %149, %150 in 1 : vector<4x24xf32>, vector<4x24xf32> -> vector<4x48xf32>
    %c0_36 = arith.constant 0 : index
    %c0_37 = arith.constant 0 : index
    %c288 = arith.constant 288 : index
    %152 = vector.load %arg8[%c0_36, %c0_37, %c288] : memref<1x4x576xf32, #tpu.memory_space<vmem>>, vector<1x4x48xf32>
    %153 = vector.shape_cast %152 : vector<1x4x48xf32> to vector<4x48xf32>
    %154 = vector.shape_cast %151 : vector<4x48xf32> to vector<1x4x48xf32>
    tpu.vector_store %arg8[%c0_36, %c0_37, %c288], %154 {strides = array<i32>} : memref<1x4x576xf32, #tpu.memory_space<vmem>>, vector<1x4x48xf32>,
    %155 = vector.extract_strided_slice %83 {offsets = [28, 0], sizes = [4, 24], strides = [1, 1]} : vector<48x24xf32> to vector<4x24xf32>
    %156 = vector.extract_strided_slice %112 {offsets = [28, 0], sizes = [4, 24], strides = [1, 1]} : vector<48x24xf32> to vector<4x24xf32>
    %157 = tpu.concatenate %155, %156 in 1 : vector<4x24xf32>, vector<4x24xf32> -> vector<4x48xf32>
    %c0_38 = arith.constant 0 : index
    %c0_39 = arith.constant 0 : index
    %c336 = arith.constant 336 : index
    %158 = vector.load %arg8[%c0_38, %c0_39, %c336] : memref<1x4x576xf32, #tpu.memory_space<vmem>>, vector<1x4x48xf32>
    %159 = vector.shape_cast %158 : vector<1x4x48xf32> to vector<4x48xf32>
    %160 = vector.shape_cast %157 : vector<4x48xf32> to vector<1x4x48xf32>
    tpu.vector_store %arg8[%c0_38, %c0_39, %c336], %160 {strides = array<i32>} : memref<1x4x576xf32, #tpu.memory_space<vmem>>, vector<1x4x48xf32>,
    %161 = vector.extract_strided_slice %83 {offsets = [32, 0], sizes = [4, 24], strides = [1, 1]} : vector<48x24xf32> to vector<4x24xf32>
    %162 = vector.extract_strided_slice %112 {offsets = [32, 0], sizes = [4, 24], strides = [1, 1]} : vector<48x24xf32> to vector<4x24xf32>
    %163 = tpu.concatenate %161, %162 in 1 : vector<4x24xf32>, vector<4x24xf32> -> vector<4x48xf32>
    %c0_40 = arith.constant 0 : index
    %c0_41 = arith.constant 0 : index
    %c384 = arith.constant 384 : index
    %164 = vector.load %arg8[%c0_40, %c0_41, %c384] : memref<1x4x576xf32, #tpu.memory_space<vmem>>, vector<1x4x48xf32>
    %165 = vector.shape_cast %164 : vector<1x4x48xf32> to vector<4x48xf32>
    %166 = vector.shape_cast %163 : vector<4x48xf32> to vector<1x4x48xf32>
    tpu.vector_store %arg8[%c0_40, %c0_41, %c384], %166 {strides = array<i32>} : memref<1x4x576xf32, #tpu.memory_space<vmem>>, vector<1x4x48xf32>,
    %167 = vector.extract_strided_slice %83 {offsets = [36, 0], sizes = [4, 24], strides = [1, 1]} : vector<48x24xf32> to vector<4x24xf32>
    %168 = vector.extract_strided_slice %112 {offsets = [36, 0], sizes = [4, 24], strides = [1, 1]} : vector<48x24xf32> to vector<4x24xf32>
    %169 = tpu.concatenate %167, %168 in 1 : vector<4x24xf32>, vector<4x24xf32> -> vector<4x48xf32>
    %c0_42 = arith.constant 0 : index
    %c0_43 = arith.constant 0 : index
    %c432 = arith.constant 432 : index
    %170 = vector.load %arg8[%c0_42, %c0_43, %c432] : memref<1x4x576xf32, #tpu.memory_space<vmem>>, vector<1x4x48xf32>
    %171 = vector.shape_cast %170 : vector<1x4x48xf32> to vector<4x48xf32>
    %172 = vector.shape_cast %169 : vector<4x48xf32> to vector<1x4x48xf32>
    tpu.vector_store %arg8[%c0_42, %c0_43, %c432], %172 {strides = array<i32>} : memref<1x4x576xf32, #tpu.memory_space<vmem>>, vector<1x4x48xf32>,
    %173 = vector.extract_strided_slice %83 {offsets = [40, 0], sizes = [4, 24], strides = [1, 1]} : vector<48x24xf32> to vector<4x24xf32>
    %174 = vector.extract_strided_slice %112 {offsets = [40, 0], sizes = [4, 24], strides = [1, 1]} : vector<48x24xf32> to vector<4x24xf32>
    %175 = tpu.concatenate %173, %174 in 1 : vector<4x24xf32>, vector<4x24xf32> -> vector<4x48xf32>
    %c0_44 = arith.constant 0 : index
    %c0_45 = arith.constant 0 : index
    %c480 = arith.constant 480 : index
    %176 = vector.load %arg8[%c0_44, %c0_45, %c480] : memref<1x4x576xf32, #tpu.memory_space<vmem>>, vector<1x4x48xf32>
    %177 = vector.shape_cast %176 : vector<1x4x48xf32> to vector<4x48xf32>
    %178 = vector.shape_cast %175 : vector<4x48xf32> to vector<1x4x48xf32>
    tpu.vector_store %arg8[%c0_44, %c0_45, %c480], %178 {strides = array<i32>} : memref<1x4x576xf32, #tpu.memory_space<vmem>>, vector<1x4x48xf32>,
    %179 = vector.extract_strided_slice %83 {offsets = [44, 0], sizes = [4, 24], strides = [1, 1]} : vector<48x24xf32> to vector<4x24xf32>
    %180 = vector.extract_strided_slice %112 {offsets = [44, 0], sizes = [4, 24], strides = [1, 1]} : vector<48x24xf32> to vector<4x24xf32>
    %181 = tpu.concatenate %179, %180 in 1 : vector<4x24xf32>, vector<4x24xf32> -> vector<4x48xf32>
    %c0_46 = arith.constant 0 : index
    %c0_47 = arith.constant 0 : index
    %c528 = arith.constant 528 : index
    %182 = vector.load %arg8[%c0_46, %c0_47, %c528] : memref<1x4x576xf32, #tpu.memory_space<vmem>>, vector<1x4x48xf32>
    %183 = vector.shape_cast %182 : vector<1x4x48xf32> to vector<4x48xf32>
    %184 = vector.shape_cast %181 : vector<4x48xf32> to vector<1x4x48xf32>
    tpu.vector_store %arg8[%c0_46, %c0_47, %c528], %184 {strides = array<i32>} : memref<1x4x576xf32, #tpu.memory_space<vmem>>, vector<1x4x48xf32>,
    return
  }
  func.func @transform_0(%arg0: i32) -> (i32, i32, i32) {
    %c0_i32 = arith.constant 0 : i32
    %c0_i32_0 = arith.constant 0 : i32
    %c0_i32_1 = arith.constant 0 : i32
    return %arg0, %c0_i32, %c0_i32_0 : i32, i32, i32
  }
  func.func @transform_1(%arg0: i32) -> (i32, i32) {
    %c0_i32 = arith.constant 0 : i32
    %c0_i32_0 = arith.constant 0 : i32
    %c0_i32_1 = arith.constant 0 : i32
    return %c0_i32, %c0_i32_0 : i32, i32
  }
  func.func @transform_2(%arg0: i32) -> (i32, i32) {
    %c0_i32 = arith.constant 0 : i32
    %c0_i32_0 = arith.constant 0 : i32
    %c0_i32_1 = arith.constant 0 : i32
    return %c0_i32, %c0_i32_0 : i32, i32
  }
  func.func @transform_3(%arg0: i32) -> (i32, i32) {
    %c0_i32 = arith.constant 0 : i32
    %c0_i32_0 = arith.constant 0 : i32
    %c0_i32_1 = arith.constant 0 : i32
    return %c0_i32, %c0_i32_0 : i32, i32
  }
  func.func @transform_4(%arg0: i32) -> (i32, i32) {
    %c0_i32 = arith.constant 0 : i32
    %c0_i32_0 = arith.constant 0 : i32
    %c0_i32_1 = arith.constant 0 : i32
    return %c0_i32, %c0_i32_0 : i32, i32
  }
  func.func @transform_5(%arg0: i32) -> (i32, i32) {
    %c0_i32 = arith.constant 0 : i32
    %c0_i32_0 = arith.constant 0 : i32
    %c0_i32_1 = arith.constant 0 : i32
    return %c0_i32, %c0_i32_0 : i32, i32
  }
  func.func @transform_6(%arg0: i32) -> (i32, i32) {
    %c0_i32 = arith.constant 0 : i32
    %c0_i32_0 = arith.constant 0 : i32
    %c0_i32_1 = arith.constant 0 : i32
    return %c0_i32, %c0_i32_0 : i32, i32
  }
  func.func @transform_7(%arg0: i32) -> (i32, i32, i32) {
    %c0_i32 = arith.constant 0 : i32
    %c0_i32_0 = arith.constant 0 : i32
    %c0_i32_1 = arith.constant 0 : i32
    return %arg0, %c0_i32, %c0_i32_0 : i32, i32, i32
  }
}

</mosaic_0001>

<llo_original>
// kernel: tile.8
$region0: #{tile.8}
  #allocation0 [shape = 's32[1]{0}', space=sflag, size = 0x4, scoped, tag = 'scoped memory for tile.8']
  %s0 = inlined_call_operand.vmem [shape: f32[4], index: 0, kind: input, shape index: {}]
  %s1 = inlined_call_operand.vmem [shape: f32[4,4], index: 1, kind: output, shape index: {}]
  // Predicated region
  $region2: #{tile.8} parent=0 // pred_check
    _
  $region3: #{tile.8} parent=0 // pred_check_branch
    %3 = sbr.rel (0) target = $region5
  $region4: #{tile.8} parent=0 // pred_region
    _
  $region5: #{tile.8} parent=0 // pred_fallthru
    _
  %v4 = vld [vmem:[%s0] ss:$0 sm:$0xff]
  %5 = vst [vmem:[%s1] sm:$0xf] %v4

// kernel: tile.0
$region0: #{tile.0}
  %s0 = inlined_call_operand.vmem [shape: f32[4,4], index: 0, kind: input, shape index: {}]
  %s1 = inlined_call_operand.vmem [shape: f32[16,1], index: 1, kind: output, shape index: {}]
  $region1: #{tile.0} parent=0
    #allocation0 [shape = 'u8[4096]{0}', space=vmem, size = 0x1000, scoped, tag = 'scoped mem for input reshape']
    %s3 = sshllo.u32 0, 4
    %v4 = vld [vmem:[%s0] sm:%s3]
    %5 = vst [vmem:[#allocation0] sm:%s3] %v4
    %v6 = vld [vmem:[#allocation0] sm:$0xf]
    %vm7 = vcmask 7168
    %8 = vst.msk [vmem:[%s1] ss:$4 sm:$0xf] %vm7, %v6
    %v9 = vld [vmem:[#allocation0] sm:$0xf]
    %10 = vrot.lane.b32.xlu0 %v9, 127
    %v11 = vpop.permute.xlu0 %10
    %vm12 = vcmask 7168
    %s13 = scalar_lea.vmem %s1, 1
    %14 = vst.msk [vmem:[%s13] ss:$4 sm:$0xf] %vm12, %v11
    %v15 = vld [vmem:[#allocation0] sm:$0xf]
    %16 = vrot.lane.b32.xlu0 %v15, 126
    %v17 = vpop.permute.xlu0 %16
    %vm18 = vcmask 7168
    %s19 = scalar_lea.vmem %s1, 2
    %20 = vst.msk [vmem:[%s19] ss:$4 sm:$0xf] %vm18, %v17
    %v21 = vld [vmem:[#allocation0] sm:$0xf]
    %22 = vrot.lane.b32.xlu0 %v21, 125
    %v23 = vpop.permute.xlu0 %22
    %vm24 = vcmask 7168
    %s25 = scalar_lea.vmem %s1, 3
    %26 = vst.msk [vmem:[%s25] ss:$4 sm:$0xf] %vm24, %v23

// kernel: decoder_block_2d.1
$region0: #{decoder_block_2d.1}
  #allocation0 [shape = 'u32[]', space=smem, size = 0x4, offset = 0x4, fixed_abs, tag = 'smem constant byte address 0x4 - core index']
  #allocation1 [shape = 'u32[144,128]{1,0:T(1,128)}', space=vmem, size = 0x12000, scoped, tag = 'internal scratch']
  %s0 = inlined_call_operand.vmem [shape: f32[2,4,256], index: 0, kind: input, shape index: {}]
  %s1 = inlined_call_operand.vmem [shape: f32[8,36], index: 1, kind: input, shape index: {}]
  %s2 = inlined_call_operand.vmem [shape: f32[8,1], index: 2, kind: input, shape index: {}]
  %s3 = inlined_call_operand.vmem [shape: f32[8,72], index: 3, kind: input, shape index: {}]
  %s4 = inlined_call_operand.vmem [shape: f32[8,1], index: 4, kind: input, shape index: {}]
  %s5 = inlined_call_operand.vmem [shape: f32[16,8], index: 5, kind: input, shape index: {}]
  %s6 = inlined_call_operand.vmem [shape: f32[16,1], index: 6, kind: input, shape index: {}]
  %s7 = inlined_call_operand.vmem [shape: f32[2,4,576], index: 7, kind: output, shape index: {}]
  %s8 = sld [smem:[#allocation0]]
  $region61: #{decoder_block_2d.1} parent=0
    _
  %s10 = ssub.s32 1, %s8
  %s11 = scalar_select 0, %s10, %s8
  loop: start=0, step=1, limit=4
  $region2: #{decoder_block_2d.1} parent=0 // loop_pre_header
    _
  $region3: #{decoder_block_2d.1} parent=0 // loop_header
    %s13 = sphi 0, %s17
    %p14 = scmp.ge.s32.totalorder %s13, 4
    %s23 = sphi 0, %s25
    %s26 = sphi 0, %s23
    %s27 = sphi 0, %s26
    %s43 = sphi 0, %s27
    %s47 = sphi 0, %s47
    %s49 = sphi 0, %s47
    %s50 = sphi 0, %s49
    %s64 = sphi 0, %s50
    %s68 = sphi 0, %s68
    %s70 = sphi 0, %s68
    %s71 = sphi 0, %s70
    %s85 = sphi 0, %s71
    %s89 = sphi 0, %s89
    %s91 = sphi 0, %s89
    %s92 = sphi 0, %s91
    %s106 = sphi 0, %s92
    %s110 = sphi 0, %s110
    %s112 = sphi 0, %s110
    %s113 = sphi 0, %s112
    %s127 = sphi 0, %s113
    %s131 = sphi 0, %s131
    %s133 = sphi 0, %s131
    %s134 = sphi 0, %s133
    %s148 = sphi 0, %s134
    %s152 = sphi 0, %s152
    %s154 = sphi 0, %s152
    %s155 = sphi 0, %s154
    %s169 = sphi 0, %s155
    %s175 = sphi 0, %s177
    %s178 = sphi 0, %s175
    %s179 = sphi 0, %s178
    %s195 = sphi 0, %s179
  $region4: #{decoder_block_2d.1} parent=0 // loop_header_branch
    %16 = sbr.rel (%p14) target = $region8
  $region5: #{decoder_block_2d.1} parent=0 // loop_body
    %s18 = ssub.s32 %s13, 1
    %s19 = ssub.s32 %s13, 2
    %s20 = sadd.s32 %s13, 1
    %s21 = ssub.s32 %s13, %s20
    %p22 = scmp.eq.s32.totalorder %s21, 0
    %s24 = sadd.s32 %s23, 1
    %s25 = scalar_select %p22, %s23, %s24
    %p28 = pneg %p22
    %p29 = scmp.eq.s32.totalorder %s13, 1
    %p30 = por %p28, %p29
    %p31 = scmp.ne.s32.totalorder %s23, %s26
    %p32 = scmp.eq.s32.totalorder %s13, 0
    %p33 = por %p31, %p32
    %p34 = scmp.ne.s32.totalorder %s23, %s26
    %p35 = scmp.eq.s32.totalorder %s18, 1
    %p36 = por %p34, %p35
    %p37 = scmp.ne.s32.totalorder %s26, %s27
    %p38 = scmp.eq.s32.totalorder %s18, 0
    %p39 = por %p37, %p38
    %p40 = scmp.ne.s32.totalorder %s26, %s27
    %p41 = scmp.eq.s32.totalorder %s19, 1
    %p42 = por %p40, %p41
    %p44 = scmp.ne.s32.totalorder %s27, %s43
    %p45 = scmp.eq.s32.totalorder %s19, 0
    %p46 = por %p44, %p45
    %s48 = sadd.s32 %s47, 1
    %p51 = scmp.eq.s32.totalorder %s13, 1
    %p52 = scmp.ne.s32.totalorder %s47, %s49
    %p53 = scmp.eq.s32.totalorder %s13, 0
    %p54 = por %p52, %p53
    %p55 = scmp.ne.s32.totalorder %s47, %s49
    %p56 = scmp.eq.s32.totalorder %s18, 1
    %p57 = por %p55, %p56
    %p58 = scmp.ne.s32.totalorder %s49, %s50
    %p59 = scmp.eq.s32.totalorder %s18, 0
    %p60 = por %p58, %p59
    %p61 = scmp.ne.s32.totalorder %s49, %s50
    %p62 = scmp.eq.s32.totalorder %s19, 1
    %p63 = por %p61, %p62
    %p65 = scmp.ne.s32.totalorder %s50, %s64
    %p66 = scmp.eq.s32.totalorder %s19, 0
    %p67 = por %p65, %p66
    %s69 = sadd.s32 %s68, 1
    %p72 = scmp.eq.s32.totalorder %s13, 1
    %p73 = scmp.ne.s32.totalorder %s68, %s70
    %p74 = scmp.eq.s32.totalorder %s13, 0
    %p75 = por %p73, %p74
    %p76 = scmp.ne.s32.totalorder %s68, %s70
    %p77 = scmp.eq.s32.totalorder %s18, 1
    %p78 = por %p76, %p77
    %p79 = scmp.ne.s32.totalorder %s70, %s71
    %p80 = scmp.eq.s32.totalorder %s18, 0
    %p81 = por %p79, %p80
    %p82 = scmp.ne.s32.totalorder %s70, %s71
    %p83 = scmp.eq.s32.totalorder %s19, 1
    %p84 = por %p82, %p83
    %p86 = scmp.ne.s32.totalorder %s71, %s85
    %p87 = scmp.eq.s32.totalorder %s19, 0
    %p88 = por %p86, %p87
    %s90 = sadd.s32 %s89, 1
    %p93 = scmp.eq.s32.totalorder %s13, 1
    %p94 = scmp.ne.s32.totalorder %s89, %s91
    %p95 = scmp.eq.s32.totalorder %s13, 0
    %p96 = por %p94, %p95
    %p97 = scmp.ne.s32.totalorder %s89, %s91
    %p98 = scmp.eq.s32.totalorder %s18, 1
    %p99 = por %p97, %p98
    %p100 = scmp.ne.s32.totalorder %s91, %s92
    %p101 = scmp.eq.s32.totalorder %s18, 0
    %p102 = por %p100, %p101
    %p103 = scmp.ne.s32.totalorder %s91, %s92
    %p104 = scmp.eq.s32.totalorder %s19, 1
    %p105 = por %p103, %p104
    %p107 = scmp.ne.s32.totalorder %s92, %s106
    %p108 = scmp.eq.s32.totalorder %s19, 0
    %p109 = por %p107, %p108
    %s111 = sadd.s32 %s110, 1
    %p114 = scmp.eq.s32.totalorder %s13, 1
    %p115 = scmp.ne.s32.totalorder %s110, %s112
    %p116 = scmp.eq.s32.totalorder %s13, 0
    %p117 = por %p115, %p116
    %p118 = scmp.ne.s32.totalorder %s110, %s112
    %p119 = scmp.eq.s32.totalorder %s18, 1
    %p120 = por %p118, %p119
    %p121 = scmp.ne.s32.totalorder %s112, %s113
    %p122 = scmp.eq.s32.totalorder %s18, 0
    %p123 = por %p121, %p122
    %p124 = scmp.ne.s32.totalorder %s112, %s113
    %p125 = scmp.eq.s32.totalorder %s19, 1
    %p126 = por %p124, %p125
    %p128 = scmp.ne.s32.totalorder %s113, %s127
    %p129 = scmp.eq.s32.totalorder %s19, 0
    %p130 = por %p128, %p129
    %s132 = sadd.s32 %s131, 1
    %p135 = scmp.eq.s32.totalorder %s13, 1
    %p136 = scmp.ne.s32.totalorder %s131, %s133
    %p137 = scmp.eq.s32.totalorder %s13, 0
    %p138 = por %p136, %p137
    %p139 = scmp.ne.s32.totalorder %s131, %s133
    %p140 = scmp.eq.s32.totalorder %s18, 1
    %p141 = por %p139, %p140
    %p142 = scmp.ne.s32.totalorder %s133, %s134
    %p143 = scmp.eq.s32.totalorder %s18, 0
    %p144 = por %p142, %p143
    %p145 = scmp.ne.s32.totalorder %s133, %s134
    %p146 = scmp.eq.s32.totalorder %s19, 1
    %p147 = por %p145, %p146
    %p149 = scmp.ne.s32.totalorder %s134, %s148
    %p150 = scmp.eq.s32.totalorder %s19, 0
    %p151 = por %p149, %p150
    %s153 = sadd.s32 %s152, 1
    %p156 = scmp.eq.s32.totalorder %s13, 1
    %p157 = scmp.ne.s32.totalorder %s152, %s154
    %p158 = scmp.eq.s32.totalorder %s13, 0
    %p159 = por %p157, %p158
    %p160 = scmp.ne.s32.totalorder %s152, %s154
    %p161 = scmp.eq.s32.totalorder %s18, 1
    %p162 = por %p160, %p161
    %p163 = scmp.ne.s32.totalorder %s154, %s155
    %p164 = scmp.eq.s32.totalorder %s18, 0
    %p165 = por %p163, %p164
    %p166 = scmp.ne.s32.totalorder %s154, %s155
    %p167 = scmp.eq.s32.totalorder %s19, 1
    %p168 = por %p166, %p167
    %p170 = scmp.ne.s32.totalorder %s155, %s169
    %p171 = scmp.eq.s32.totalorder %s19, 0
    %p172 = por %p170, %p171
    %s173 = ssub.s32 %s13, %s20
    %p174 = scmp.eq.s32.totalorder %s173, 0
    %s176 = sadd.s32 %s175, 1
    %s177 = scalar_select %p174, %s175, %s176
    %p180 = pneg %p174
    %p181 = scmp.eq.s32.totalorder %s13, 1
    %p182 = por %p180, %p181
    %p183 = scmp.ne.s32.totalorder %s175, %s178
    %p184 = scmp.eq.s32.totalorder %s13, 0
    %p185 = por %p183, %p184
    %p186 = scmp.ne.s32.totalorder %s175, %s178
    %p187 = scmp.eq.s32.totalorder %s18, 1
    %p188 = por %p186, %p187
    %p189 = scmp.ne.s32.totalorder %s178, %s179
    %p190 = scmp.eq.s32.totalorder %s18, 0
    %p191 = por %p189, %p190
    %p192 = scmp.ne.s32.totalorder %s178, %s179
    %p193 = scmp.eq.s32.totalorder %s19, 1
    %p194 = por %p192, %p193
    %p196 = scmp.ne.s32.totalorder %s179, %s195
    %p197 = scmp.eq.s32.totalorder %s19, 0
    %p198 = por %p196, %p197
    %p199 = scmp.le.s32.totalorder 1, %s13
    %p200 = scmp.lt.s32.totalorder %s13, 3
    %p201 = pnand %p199, %p200
    %p202 = pneg %p201
    // Predicated region
    $region9: #{decoder_block_2d.1} parent=5 // pred_check
      _
    $region10: #{decoder_block_2d.1} parent=5 // pred_check_branch
      %204 = sbr.rel (%p201) target = $region12
    $region11: #{decoder_block_2d.1} parent=5 // pred_region
      %s205 = ssub.s32 %s13, 1
      // Predicated region
      $region13: #{decoder_block_2d.1} parent=11 // pred_check
        %p206 = pneg %p60
      $region14: #{decoder_block_2d.1} parent=11 // pred_check_branch
        %208 = sbr.rel (%p206) target = $region16
      $region15: #{decoder_block_2d.1} parent=11 // pred_region
        _
      $region16: #{decoder_block_2d.1} parent=11 // pred_fallthru
        _
      // Predicated region
      $region17: #{decoder_block_2d.1} parent=11 // pred_check
        %p209 = pneg %p81
      $region18: #{decoder_block_2d.1} parent=11 // pred_check_branch
        %211 = sbr.rel (%p209) target = $region20
      $region19: #{decoder_block_2d.1} parent=11 // pred_region
        _
      $region20: #{decoder_block_2d.1} parent=11 // pred_fallthru
        _
      // Predicated region
      $region21: #{decoder_block_2d.1} parent=11 // pred_check
        %p212 = pneg %p102
      $region22: #{decoder_block_2d.1} parent=11 // pred_check_branch
        %214 = sbr.rel (%p212) target = $region24
      $region23: #{decoder_block_2d.1} parent=11 // pred_region
        _
      $region24: #{decoder_block_2d.1} parent=11 // pred_fallthru
        _
      // Predicated region
      $region25: #{decoder_block_2d.1} parent=11 // pred_check
        %p215 = pneg %p123
      $region26: #{decoder_block_2d.1} parent=11 // pred_check_branch
        %217 = sbr.rel (%p215) target = $region28
      $region27: #{decoder_block_2d.1} parent=11 // pred_region
        _
      $region28: #{decoder_block_2d.1} parent=11 // pred_fallthru
        _
      // Predicated region
      $region29: #{decoder_block_2d.1} parent=11 // pred_check
        %p218 = pneg %p144
      $region30: #{decoder_block_2d.1} parent=11 // pred_check_branch
        %220 = sbr.rel (%p218) target = $region32
      $region31: #{decoder_block_2d.1} parent=11 // pred_region
        _
      $region32: #{decoder_block_2d.1} parent=11 // pred_fallthru
        _
      // Predicated region
      $region33: #{decoder_block_2d.1} parent=11 // pred_check
        %p221 = pneg %p165
      $region34: #{decoder_block_2d.1} parent=11 // pred_check_branch
        %223 = sbr.rel (%p221) target = $region36
      $region35: #{decoder_block_2d.1} parent=11 // pred_region
        _
      $region36: #{decoder_block_2d.1} parent=11 // pred_fallthru
        _
    $region12: #{decoder_block_2d.1} parent=5 // pred_fallthru
      _
    %p224 = scmp.lt.s32.totalorder %s13, 2
    // Predicated region
    $region37: #{decoder_block_2d.1} parent=5 // pred_check
      %p225 = pneg %p224
    $region38: #{decoder_block_2d.1} parent=5 // pred_check_branch
      %227 = sbr.rel (%p225) target = $region40
    $region39: #{decoder_block_2d.1} parent=5 // pred_region
      // Predicated region
      $region41: #{decoder_block_2d.1} parent=39 // pred_check
        %p228 = pneg %p33
      $region42: #{decoder_block_2d.1} parent=39 // pred_check_branch
        %230 = sbr.rel (%p228) target = $region44
      $region43: #{decoder_block_2d.1} parent=39 // pred_region
        %p231 = scmp.lt.s32.totalorder %s13, 1
        %s232 = scalar_select %p231, %s13, 1
        %s233 = smul.addr %s232, 2
        %s234 = smul.addr %s233, 4
        %s235 = scalar_lea.vmem %s0, %s234
      $region44: #{decoder_block_2d.1} parent=39 // pred_fallthru
        _
    $region40: #{decoder_block_2d.1} parent=5 // pred_fallthru
      _
    %p236 = scmp.le.s32.totalorder 1, %s13
    %p237 = scmp.lt.s32.totalorder %s13, 3
    %p238 = pnand %p236, %p237
    %p239 = pneg %p238
    // Predicated region
    $region45: #{decoder_block_2d.1} parent=5 // pred_check
      _
    $region46: #{decoder_block_2d.1} parent=5 // pred_check_branch
      %241 = sbr.rel (%p238) target = $region48
    $region47: #{decoder_block_2d.1} parent=5 // pred_region
      %s242 = ssub.s32 %s13, 1
      %p243 = scmp.lt.s32.totalorder %s18, 1
      %s244 = scalar_select %p243, %s18, 1
      %s245 = smul.addr %s244, 2
      %s246 = smul.addr %s245, 4
      %s247 = scalar_lea.vmem %s0, %s246
      %p248 = pneg %p39
      %p249 = pneg %p36
      %p250 = pneg %p60
      %p251 = pneg %p57
      %p252 = pneg %p81
      %p253 = pneg %p78
      %p254 = pneg %p102
      %p255 = pneg %p99
      %p256 = pneg %p123
      %p257 = pneg %p120
      %p258 = pneg %p144
      %p259 = pneg %p141
      %p260 = pneg %p165
      %p261 = pneg %p162
      %p262 = pneg %p191
      %p263 = pneg %p188
      %p264 = scmp.lt.s32.totalorder %s18, 1
      %s265 = scalar_select %p264, %s18, 1
      %s266 = smul.addr %s265, 5
      %s267 = smul.addr %s266, 4
      %s268 = scalar_lea.vmem %s7, %s267
      %p269 = scmp.lt.s32.totalorder %s18, 1
      %s270 = scalar_select %p269, %s18, 1
      %s271 = smul.addr %s270, 2
      %s272 = smul.addr %s271, 4
      %s273 = scalar_lea.vmem %s0, %s272
      %p274 = scmp.lt.s32.totalorder %s18, 1
      %s275 = scalar_select %p274, %s18, 1
      %s276 = smul.addr %s275, 5
      %s277 = smul.addr %s276, 4
      %s278 = scalar_lea.vmem %s7, %s277
      %v279 = vld [vmem:[%s273] sm:$0xff]
      %v281 = vcombine.high %v279, %v279
      %v283 = vcombine.low %v279, %v279
      %284 = vrot.lane.b32.xlu0 %v283, 127
      %v285 = vpop.permute.xlu0 %284
      %286 = vrot.lane.b32.xlu0 %v279, 127
      %v287 = vpop.permute.xlu0 %286
      %vm288 = vcmask 1039360
      %v289 = vsel %vm288, %v285, %v287
      %292 = vrot.lane.b32.xlu0 %v279, 126
      %v293 = vpop.permute.xlu0 %292
      %294 = vrot.lane.b32.xlu0 %v281, 126
      %v295 = vpop.permute.xlu0 %294
      %vm296 = vcmask 1031168
      %v297 = vsel %vm296, %v293, %v295
      %300 = vrot.lane.b32.xlu0 %v283, 112
      %v301 = vpop.permute.xlu0 %300
      %302 = vrot.lane.b32.xlu0 %v279, 112
      %v303 = vpop.permute.xlu0 %302
      %vm304 = vcmask 916480
      %v305 = vsel %vm304, %v301, %v303
      %308 = vrot.lane.b32.xlu0 %v279, 111
      %v309 = vpop.permute.xlu0 %308
      %310 = vrot.lane.b32.xlu0 %v281, 111
      %v311 = vpop.permute.xlu0 %310
      %vm312 = vcmask 908288
      %v313 = vsel %vm312, %v309, %v311
      %316 = vrot.lane.b32.xlu0 %v283, 110
      %v317 = vpop.permute.xlu0 %316
      %318 = vrot.lane.b32.xlu0 %v279, 110
      %v319 = vpop.permute.xlu0 %318
      %vm320 = vcmask 900096
      %v321 = vsel %vm320, %v317, %v319
      %324 = vrot.lane.b32.xlu0 %v279, 96
      %v325 = vpop.permute.xlu0 %324
      %326 = vrot.lane.b32.xlu0 %v281, 96
      %v327 = vpop.permute.xlu0 %326
      %vm328 = vcmask 785408
      %v329 = vsel %vm328, %v325, %v327
      %332 = vrot.lane.b32.xlu0 %v283, 95
      %v333 = vpop.permute.xlu0 %332
      %334 = vrot.lane.b32.xlu0 %v279, 95
      %v335 = vpop.permute.xlu0 %334
      %vm336 = vcmask 777216
      %v337 = vsel %vm336, %v333, %v335
      %340 = vrot.lane.b32.xlu0 %v279, 94
      %v341 = vpop.permute.xlu0 %340
      %342 = vrot.lane.b32.xlu0 %v281, 94
      %v343 = vpop.permute.xlu0 %342
      %vm344 = vcmask 769024
      %v345 = vsel %vm344, %v341, %v343
      %vm346 = vcmask 1043456
      %v347 = vsel %vm346, %v279, %v289
      %v348 = vsel %vm346, %v281, %v287
      %v349 = vsel %vm346, %v297, %v305
      %v350 = vsel %vm346, %v295, %v303
      %v351 = vsel %vm346, %v313, %v321
      %v352 = vsel %vm346, %v311, %v319
      %v353 = vsel %vm346, %v329, %v337
      %v354 = vsel %vm346, %v327, %v335
      %v355 = vld [vmem:[%s1] sm:$0xff]
      %v356 = vld [vmem:[%s2] sm:$0xff]
      %358 = vset.pattern.permute.xlu0 0
      %359 = vperm.xlu0 %358, %v356
      %v360 = vpop.permute.xlu0 %359
      %vm362 = vcmask 293888
      %v364 = vsel %vm362, %v355, 0
      %v366 = vsel %vm346, %v345, 0
      %v368 = vsel %vm346, %v343, 0
      %370 = vmatprep.subr.mxu0 %v348
      %371 = vmatpush1.msra.mxu0 %v347
      %372 = vmatprep.subr.mxu0 %v350
      %373 = vmatpush1.msra.mxu0 %v349
      %374 = vmatprep.subr.mxu0 %v352
      %375 = vmatpush1.msra.mxu0 %v351
      %376 = vmatprep.subr.mxu0 %v354
      %377 = vmatpush1.msra.mxu0 %v353
      %378 = vmatprep.subr.mxu0 %v368
      %379 = vmatpush1.msra.mxu0 %v366
      %380 = vmatprep.subr.mxu0 0.0
      %381 = vmatpush1.msra.mxu0 0.0
      %382 = vmatprep.subr.mxu0 0.0
      %383 = vmatpush1.msra.mxu0 0.0
      %384 = vmatprep.subr.mxu0 0.0
      %385 = vmatpush1.msra.mxu0 0.0
      %386 = vmatprep.subr.mxu0 0.0
      %387 = vmatpush1.msra.mxu0 0.0
      %388 = vmatprep.subr.mxu0 0.0
      %389 = vmatpush1.msra.mxu0 0.0
      %390 = vmatprep.subr.mxu0 0.0
      %391 = vmatpush1.msra.mxu0 0.0
      %392 = vmatprep.subr.mxu0 0.0
      %393 = vmatpush1.msra.mxu0 0.0
      %394 = vmatprep.subr.mxu0 0.0
      %395 = vmatpush1.msra.mxu0 0.0
      %396 = vmatprep.subr.mxu0 0.0
      %397 = vmatpush1.msra.mxu0 0.0
      %398 = vmatprep.subr.mxu0 0.0
      %399 = vmatpush1.msra.mxu0 0.0
      %400 = vmatprep.subr.mxu0 0.0
      %401 = vmatpush1.msra.mxu0 0.0
      %402 = vmatprep.subr.mxu0 0.0
      %403 = vmatpush1.msra.mxu0 0.0
      %404 = vmatprep.subr.mxu0 0.0
      %405 = vmatpush1.msra.mxu0 0.0
      %406 = vmatprep.subr.mxu0 0.0
      %407 = vmatpush1.msra.mxu0 0.0
      %408 = vmatprep.subr.mxu0 0.0
      %409 = vmatpush1.msra.mxu0 0.0
      %410 = vmatprep.subr.mxu0 0.0
      %411 = vmatpush1.msra.mxu0 0.0
      %412 = vmatprep.subr.mxu0 0.0
      %413 = vmatpush1.msra.mxu0 0.0
      %414 = vmatprep.subr.mxu0 0.0
      %415 = vmatpush1.msra.mxu0 0.0
      %416 = vmatprep.subr.mxu0 0.0
      %417 = vmatpush1.msra.mxu0 0.0
      %418 = vmatprep.subr.mxu0 0.0
      %419 = vmatpush1.msra.mxu0 0.0
      %420 = vmatprep.subr.mxu0 0.0
      %421 = vmatpush1.msra.mxu0 0.0
      %422 = vmatprep.subr.mxu0 0.0
      %423 = vmatpush1.msra.mxu0 0.0
      %424 = vmatprep.subr.mxu0 0.0
      %425 = vmatpush1.msra.mxu0 0.0
      %426 = vmatprep.subr.mxu0 0.0
      %427 = vmatpush1.msra.mxu0 0.0
      %428 = vmatprep.subr.mxu0 0.0
      %429 = vmatpush1.msra.mxu0 0.0
      %430 = vmatprep.subr.mxu0 0.0
      %431 = vmatpush1.msra.mxu0 0.0
      %432 = vmatprep.subr.mxu0 0.0
      %433 = vmatpush1.msra.mxu0 0.0
      %434 = vmatprep.mubr.f32.mxu0 0.0
      %435 = vmatmul.mubr.f32.gmra.mrb[0].mxu0 %v364
      %v436 = vpop.f32.mrb[0].mxu0
      %v437 = vadd.f32 %v360, %v436
      %v438 = vpop.f32.mrb[0].mxu0
      %v439 = vadd.f32 %v360, %v438
      %440 = vdwg.mxu0
      %v441 = vmax.f32 %v437, 0.0
      %v442 = vmax.f32 %v439, 0.0
      %445 = vrot.lane.b32.xlu0 %v441, 127
      %v446 = vpop.permute.xlu0 %445
      %447 = vrot.lane.b32.xlu0 %v442, 127
      %v448 = vpop.permute.xlu0 %447
      %v449 = vsel %vm288, %v446, %v448
      %452 = vrot.lane.b32.xlu0 %v441, 126
      %v453 = vpop.permute.xlu0 %452
      %454 = vrot.lane.b32.xlu0 %v442, 126
      %v455 = vpop.permute.xlu0 %454
      %v456 = vsel %vm296, %v453, %v455
      %459 = vrot.lane.b32.xlu0 %v441, 112
      %v460 = vpop.permute.xlu0 %459
      %461 = vrot.lane.b32.xlu0 %v442, 112
      %v462 = vpop.permute.xlu0 %461
      %v463 = vsel %vm304, %v460, %v462
      %466 = vrot.lane.b32.xlu0 %v441, 111
      %v467 = vpop.permute.xlu0 %466
      %468 = vrot.lane.b32.xlu0 %v442, 111
      %v469 = vpop.permute.xlu0 %468
      %v470 = vsel %vm312, %v467, %v469
      %473 = vrot.lane.b32.xlu0 %v441, 110
      %v474 = vpop.permute.xlu0 %473
      %475 = vrot.lane.b32.xlu0 %v442, 110
      %v476 = vpop.permute.xlu0 %475
      %v477 = vsel %vm320, %v474, %v476
      %480 = vrot.lane.b32.xlu0 %v441, 96
      %v481 = vpop.permute.xlu0 %480
      %482 = vrot.lane.b32.xlu0 %v442, 96
      %v483 = vpop.permute.xlu0 %482
      %v484 = vsel %vm328, %v481, %v483
      %487 = vrot.lane.b32.xlu0 %v441, 95
      %v488 = vpop.permute.xlu0 %487
      %489 = vrot.lane.b32.xlu0 %v442, 95
      %v490 = vpop.permute.xlu0 %489
      %v491 = vsel %vm336, %v488, %v490
      %494 = vrot.lane.b32.xlu0 %v441, 94
      %v495 = vpop.permute.xlu0 %494
      %496 = vrot.lane.b32.xlu0 %v442, 94
      %v497 = vpop.permute.xlu0 %496
      %v498 = vsel %vm344, %v495, %v497
      %v501 = vld [vmem:[%s3] sm:$0xff]
      %v502 = vld [vmem:[%s4] sm:$0xff]
      %504 = vset.pattern.permute.xlu0 0
      %505 = vperm.xlu0 %504, %v502
      %v506 = vpop.permute.xlu0 %505
      %vm508 = vcmask 588800
      %v510 = vsel %vm508, %v501, 0
      %512 = vmatprep.subr.mxu0 %v442
      %513 = vmatpush1.msra.mxu0 %v441
      %514 = vmatprep.subr.mxu0 %v448
      %515 = vmatpush1.msra.mxu0 %v449
      %516 = vmatprep.subr.mxu0 %v455
      %517 = vmatpush1.msra.mxu0 %v456
      %518 = vmatprep.subr.mxu0 %v462
      %519 = vmatpush1.msra.mxu0 %v463
      %520 = vmatprep.subr.mxu0 %v469
      %521 = vmatpush1.msra.mxu0 %v470
      %522 = vmatprep.subr.mxu0 %v476
      %523 = vmatpush1.msra.mxu0 %v477
      %524 = vmatprep.subr.mxu0 %v483
      %525 = vmatpush1.msra.mxu0 %v484
      %526 = vmatprep.subr.mxu0 %v490
      %527 = vmatpush1.msra.mxu0 %v491
      %528 = vmatprep.subr.mxu0 %v497
      %529 = vmatpush1.msra.mxu0 %v498
      %530 = vmatprep.subr.mxu0 0.0
      %531 = vmatpush1.msra.mxu0 0.0
      %532 = vmatprep.subr.mxu0 0.0
      %533 = vmatpush1.msra.mxu0 0.0
      %534 = vmatprep.subr.mxu0 0.0
      %535 = vmatpush1.msra.mxu0 0.0
      %536 = vmatprep.subr.mxu0 0.0
      %537 = vmatpush1.msra.mxu0 0.0
      %538 = vmatprep.subr.mxu0 0.0
      %539 = vmatpush1.msra.mxu0 0.0
      %540 = vmatprep.subr.mxu0 0.0
      %541 = vmatpush1.msra.mxu0 0.0
      %542 = vmatprep.subr.mxu0 0.0
      %543 = vmatpush1.msra.mxu0 0.0
      %544 = vmatprep.subr.mxu0 0.0
      %545 = vmatpush1.msra.mxu0 0.0
      %546 = vmatprep.subr.mxu0 0.0
      %547 = vmatpush1.msra.mxu0 0.0
      %548 = vmatprep.subr.mxu0 0.0
      %549 = vmatpush1.msra.mxu0 0.0
      %550 = vmatprep.subr.mxu0 0.0
      %551 = vmatpush1.msra.mxu0 0.0
      %552 = vmatprep.subr.mxu0 0.0
      %553 = vmatpush1.msra.mxu0 0.0
      %554 = vmatprep.subr.mxu0 0.0
      %555 = vmatpush1.msra.mxu0 0.0
      %556 = vmatprep.subr.mxu0 0.0
      %557 = vmatpush1.msra.mxu0 0.0
      %558 = vmatprep.subr.mxu0 0.0
      %559 = vmatpush1.msra.mxu0 0.0
      %560 = vmatprep.subr.mxu0 0.0
      %561 = vmatpush1.msra.mxu0 0.0
      %562 = vmatprep.subr.mxu0 0.0
      %563 = vmatpush1.msra.mxu0 0.0
      %564 = vmatprep.subr.mxu0 0.0
      %565 = vmatpush1.msra.mxu0 0.0
      %566 = vmatprep.subr.mxu0 0.0
      %567 = vmatpush1.msra.mxu0 0.0
      %568 = vmatprep.subr.mxu0 0.0
      %569 = vmatpush1.msra.mxu0 0.0
      %570 = vmatprep.subr.mxu0 0.0
      %571 = vmatpush1.msra.mxu0 0.0
      %572 = vmatprep.subr.mxu0 0.0
      %573 = vmatpush1.msra.mxu0 0.0
      %574 = vmatprep.subr.mxu0 0.0
      %575 = vmatpush1.msra.mxu0 0.0
      %576 = vmatprep.mubr.f32.mxu0 0.0
      %577 = vmatmul.mubr.f32.gmra.mrb[0].mxu0 %v510
      %v578 = vpop.f32.mrb[0].mxu0
      %v579 = vadd.f32 %v506, %v578
      %v580 = vpop.f32.mrb[0].mxu0
      %v581 = vadd.f32 %v506, %v580
      %582 = vdwg.mxu0
      %v583 = vmax.f32 %v579, 0.0
      %v584 = vmax.f32 %v581, 0.0
      %v585 = vld [vmem:[%s5] sm:$0xff]
      %v586 = vld [vmem:[%s5 + $0x8] sm:$0xff]
      %v587 = vld [vmem:[%s6] sm:$0xff]
      %v588 = vld [vmem:[%s6 + $0x8] sm:$0xff]
      %590 = vset.pattern.permute.xlu0 0
      %591 = vperm.xlu0 %590, %v587
      %v592 = vpop.permute.xlu0 %591
      %595 = vset.pattern.permute.xlu0 0
      %596 = vperm.xlu0 %595, %v588
      %v597 = vpop.permute.xlu0 %596
      %vm599 = vcmask 64512
      %v601 = vsel %vm599, %v585, 0
      %v604 = vsel %vm599, %v586, 0
      %606 = vmatprep.subr.mxu0 %v584
      %607 = vmatpush1.msra.mxu0 %v583
      %608 = vmatprep.subr.mxu0 0.0
      %609 = vmatpush1.msra.mxu0 0.0
      %610 = vmatprep.subr.mxu0 0.0
      %611 = vmatpush1.msra.mxu0 0.0
      %612 = vmatprep.subr.mxu0 0.0
      %613 = vmatpush1.msra.mxu0 0.0
      %614 = vmatprep.subr.mxu0 0.0
      %615 = vmatpush1.msra.mxu0 0.0
      %616 = vmatprep.subr.mxu0 0.0
      %617 = vmatpush1.msra.mxu0 0.0
      %618 = vmatprep.subr.mxu0 0.0
      %619 = vmatpush1.msra.mxu0 0.0
      %620 = vmatprep.subr.mxu0 0.0
      %621 = vmatpush1.msra.mxu0 0.0
      %622 = vmatprep.subr.mxu0 0.0
      %623 = vmatpush1.msra.mxu0 0.0
      %624 = vmatprep.subr.mxu0 0.0
      %625 = vmatpush1.msra.mxu0 0.0
      %626 = vmatprep.subr.mxu0 0.0
      %627 = vmatpush1.msra.mxu0 0.0
      %628 = vmatprep.subr.mxu0 0.0
      %629 = vmatpush1.msra.mxu0 0.0
      %630 = vmatprep.subr.mxu0 0.0
      %631 = vmatpush1.msra.mxu0 0.0
      %632 = vmatprep.subr.mxu0 0.0
      %633 = vmatpush1.msra.mxu0 0.0
      %634 = vmatprep.subr.mxu0 0.0
      %635 = vmatpush1.msra.mxu0 0.0
      %636 = vmatprep.subr.mxu0 0.0
      %637 = vmatpush1.msra.mxu0 0.0
      %638 = vmatprep.subr.mxu0 0.0
      %639 = vmatpush1.msra.mxu0 0.0
      %640 = vmatprep.subr.mxu0 0.0
      %641 = vmatpush1.msra.mxu0 0.0
      %642 = vmatprep.subr.mxu0 0.0
      %643 = vmatpush1.msra.mxu0 0.0
      %644 = vmatprep.subr.mxu0 0.0
      %645 = vmatpush1.msra.mxu0 0.0
      %646 = vmatprep.subr.mxu0 0.0
      %647 = vmatpush1.msra.mxu0 0.0
      %648 = vmatprep.subr.mxu0 0.0
      %649 = vmatpush1.msra.mxu0 0.0
      %650 = vmatprep.subr.mxu0 0.0
      %651 = vmatpush1.msra.mxu0 0.0
      %652 = vmatprep.subr.mxu0 0.0
      %653 = vmatpush1.msra.mxu0 0.0
      %654 = vmatprep.subr.mxu0 0.0
      %655 = vmatpush1.msra.mxu0 0.0
      %656 = vmatprep.subr.mxu0 0.0
      %657 = vmatpush1.msra.mxu0 0.0
      %658 = vmatprep.subr.mxu0 0.0
      %659 = vmatpush1.msra.mxu0 0.0
      %660 = vmatprep.subr.mxu0 0.0
      %661 = vmatpush1.msra.mxu0 0.0
      %662 = vmatprep.subr.mxu0 0.0
      %663 = vmatpush1.msra.mxu0 0.0
      %664 = vmatprep.subr.mxu0 0.0
      %665 = vmatpush1.msra.mxu0 0.0
      %666 = vmatprep.subr.mxu0 0.0
      %667 = vmatpush1.msra.mxu0 0.0
      %668 = vmatprep.subr.mxu0 0.0
      %669 = vmatpush1.msra.mxu0 0.0
      %670 = vmatprep.mubr.f32.mxu0 0.0
      %671 = vmatmul.mubr.f32.gmra.mrb[0].mxu0 %v601
      %v672 = vpop.f32.mrb[0].mxu0
      %v673 = vadd.f32 %v592, %v672
      %v674 = vpop.f32.mrb[0].mxu0
      %v675 = vadd.f32 %v592, %v674
      %676 = vmatprep.mubr.f32.mxu0 0.0
      %677 = vmatmul.mubr.f32.gmra.mrb[0].mxu0 %v604
      %v678 = vpop.f32.mrb[0].mxu0
      %v679 = vadd.f32 %v597, %v678
      %v680 = vpop.f32.mrb[0].mxu0
      %v681 = vadd.f32 %v597, %v680
      %682 = vdwg.mxu0
      %v683 = vlaneseq
      %v684 = vshrl.u32 %v683, 7
      %v685 = vadd.s32 %v684, 8
      %v686 = vlaneseq
      %v687 = vand.u32 %v686, 127
      %v688 = vmul.u32 %v684, 2
      %v689 = vmul.u32 %v685, 2
      %vm690 = vcmp.eq.s32.totalorder %v687, %v688
      %vm691 = vcmp.eq.s32.totalorder %v687, %v689
      %v692 = vsel %vm690, 1, 0
      %v693 = vsel %vm691, 1, 0
      %v694 = vcvt.s32.f32 %v692
      %v695 = vcvt.s32.f32 %v693
      %v696 = vadd.s32 %v688, 1
      %v697 = vadd.s32 %v689, 1
      %vm698 = vcmp.eq.s32.totalorder %v687, %v696
      %vm699 = vcmp.eq.s32.totalorder %v687, %v697
      %v700 = vsel %vm698, 1, 0
      %v701 = vsel %vm699, 1, 0
      %v702 = vcvt.s32.f32 %v700
      %v703 = vcvt.s32.f32 %v701
      %v705 = vrot.slane %v673, 4
      %706 = vrot.lane.b32.xlu0 %v705, 112
      %v707 = vpop.permute.xlu0 %706
      %709 = vrot.lane.b32.xlu0 %v673, 96
      %v710 = vpop.permute.xlu0 %709
      %712 = vrot.lane.b32.xlu0 %v705, 80
      %v713 = vpop.permute.xlu0 %712
      %715 = vrot.lane.b32.xlu0 %v673, 64
      %v716 = vpop.permute.xlu0 %715
      %718 = vrot.lane.b32.xlu0 %v705, 48
      %v719 = vpop.permute.xlu0 %718
      %721 = vrot.lane.b32.xlu0 %v673, 32
      %v722 = vpop.permute.xlu0 %721
      %724 = vrot.lane.b32.xlu0 %v705, 16
      %v725 = vpop.permute.xlu0 %724
      %v728 = vrot.slane %v675, 4
      %729 = vrot.lane.b32.xlu0 %v728, 112
      %v730 = vpop.permute.xlu0 %729
      %732 = vrot.lane.b32.xlu0 %v675, 96
      %v733 = vpop.permute.xlu0 %732
      %735 = vrot.lane.b32.xlu0 %v728, 80
      %v736 = vpop.permute.xlu0 %735
      %v738 = vsel %vm346, %v673, %v707
      %v739 = vsel %vm346, %v710, %v713
      %v740 = vsel %vm346, %v716, %v719
      %v741 = vsel %vm346, %v722, %v725
      %v742 = vsel %vm346, %v675, %v730
      %v743 = vsel %vm346, %v733, %v736
      %745 = vrot.lane.b32.xlu0 %v673, 112
      %v746 = vpop.permute.xlu0 %745
      %748 = vrot.lane.b32.xlu0 %v705, 96
      %v749 = vpop.permute.xlu0 %748
      %751 = vrot.lane.b32.xlu0 %v673, 80
      %v752 = vpop.permute.xlu0 %751
      %754 = vrot.lane.b32.xlu0 %v705, 64
      %v755 = vpop.permute.xlu0 %754
      %757 = vrot.lane.b32.xlu0 %v673, 48
      %v758 = vpop.permute.xlu0 %757
      %760 = vrot.lane.b32.xlu0 %v705, 32
      %v761 = vpop.permute.xlu0 %760
      %763 = vrot.lane.b32.xlu0 %v673, 16
      %v764 = vpop.permute.xlu0 %763
      %767 = vrot.lane.b32.xlu0 %v675, 112
      %v768 = vpop.permute.xlu0 %767
      %770 = vrot.lane.b32.xlu0 %v728, 96
      %v771 = vpop.permute.xlu0 %770
      %773 = vrot.lane.b32.xlu0 %v675, 80
      %v774 = vpop.permute.xlu0 %773
      %v776 = vsel %vm346, %v705, %v746
      %v777 = vsel %vm346, %v749, %v752
      %v778 = vsel %vm346, %v755, %v758
      %v779 = vsel %vm346, %v761, %v764
      %v780 = vsel %vm346, %v728, %v768
      %v781 = vsel %vm346, %v771, %v774
      %vm782 = vcmask 97280
      %v784 = vsel %vm782, %v776, 0
      %v787 = vsel %vm782, %v777, 0
      %v790 = vsel %vm782, %v778, 0
      %v793 = vsel %vm782, %v779, 0
      %v796 = vsel %vm782, %v780, 0
      %v799 = vsel %vm782, %v781, 0
      %v802 = vsel %vm346, %v703, 0
      %804 = vmatprep.subr.mxu0 0.0
      %805 = vmatpush1.msra.mxu0 %v702
      %806 = vmatprep.subr.mxu0 0.0
      %807 = vmatpush1.msra.mxu0 %v802
      %808 = vmatprep.subr.mxu0 0.0
      %809 = vmatpush1.msra.mxu0 0.0
      %810 = vmatprep.subr.mxu0 0.0
      %811 = vmatpush1.msra.mxu0 0.0
      %812 = vmatprep.subr.mxu0 0.0
      %813 = vmatpush1.msra.mxu0 0.0
      %814 = vmatprep.subr.mxu0 0.0
      %815 = vmatpush1.msra.mxu0 0.0
      %816 = vmatprep.subr.mxu0 0.0
      %817 = vmatpush1.msra.mxu0 0.0
      %818 = vmatprep.subr.mxu0 0.0
      %819 = vmatpush1.msra.mxu0 0.0
      %820 = vmatprep.subr.mxu0 0.0
      %821 = vmatpush1.msra.mxu0 0.0
      %822 = vmatprep.subr.mxu0 0.0
      %823 = vmatpush1.msra.mxu0 0.0
      %824 = vmatprep.subr.mxu0 0.0
      %825 = vmatpush1.msra.mxu0 0.0
      %826 = vmatprep.subr.mxu0 0.0
      %827 = vmatpush1.msra.mxu0 0.0
      %828 = vmatprep.subr.mxu0 0.0
      %829 = vmatpush1.msra.mxu0 0.0
      %830 = vmatprep.subr.mxu0 0.0
      %831 = vmatpush1.msra.mxu0 0.0
      %832 = vmatprep.subr.mxu0 0.0
      %833 = vmatpush1.msra.mxu0 0.0
      %834 = vmatprep.subr.mxu0 0.0
      %835 = vmatpush1.msra.mxu0 0.0
      %836 = vmatprep.subr.mxu0 0.0
      %837 = vmatpush1.msra.mxu0 0.0
      %838 = vmatprep.subr.mxu0 0.0
      %839 = vmatpush1.msra.mxu0 0.0
      %840 = vmatprep.subr.mxu0 0.0
      %841 = vmatpush1.msra.mxu0 0.0
      %842 = vmatprep.subr.mxu0 0.0
      %843 = vmatpush1.msra.mxu0 0.0
      %844 = vmatprep.subr.mxu0 0.0
      %845 = vmatpush1.msra.mxu0 0.0
      %846 = vmatprep.subr.mxu0 0.0
      %847 = vmatpush1.msra.mxu0 0.0
      %848 = vmatprep.subr.mxu0 0.0
      %849 = vmatpush1.msra.mxu0 0.0
      %850 = vmatprep.subr.mxu0 0.0
      %851 = vmatpush1.msra.mxu0 0.0
      %852 = vmatprep.subr.mxu0 0.0
      %853 = vmatpush1.msra.mxu0 0.0
      %854 = vmatprep.subr.mxu0 0.0
      %855 = vmatpush1.msra.mxu0 0.0
      %856 = vmatprep.subr.mxu0 0.0
      %857 = vmatpush1.msra.mxu0 0.0
      %858 = vmatprep.subr.mxu0 0.0
      %859 = vmatpush1.msra.mxu0 0.0
      %860 = vmatprep.subr.mxu0 0.0
      %861 = vmatpush1.msra.mxu0 0.0
      %862 = vmatprep.subr.mxu0 0.0
      %863 = vmatpush1.msra.mxu0 0.0
      %864 = vmatprep.subr.mxu0 0.0
      %865 = vmatpush1.msra.mxu0 0.0
      %866 = vmatprep.subr.mxu0 0.0
      %867 = vmatpush1.msra.mxu0 0.0
      %868 = vmatprep.mubr.f32.mxu0 0.0
      %869 = vmatmul.mubr.f32.gmra.mrb[0].mxu0 %v784
      %v870 = vpop.f32.mrb[0].mxu0
      %v871 = vadd.f32 0.0, %v870
      %v872 = vpop.f32.mrb[0].mxu0
      %873 = vmatprep.mubr.f32.mxu0 0.0
      %874 = vmatmul.mubr.f32.gmra.mrb[0].mxu0 %v787
      %v875 = vpop.f32.mrb[0].mxu0
      %v876 = vadd.f32 0.0, %v875
      %v877 = vpop.f32.mrb[0].mxu0
      %878 = vmatprep.mubr.f32.mxu0 0.0
      %879 = vmatmul.mubr.f32.gmra.mrb[0].mxu0 %v790
      %v880 = vpop.f32.mrb[0].mxu0
      %v881 = vadd.f32 0.0, %v880
      %v882 = vpop.f32.mrb[0].mxu0
      %883 = vmatprep.mubr.f32.mxu0 0.0
      %884 = vmatmul.mubr.f32.gmra.mrb[0].mxu0 %v793
      %v885 = vpop.f32.mrb[0].mxu0
      %v886 = vadd.f32 0.0, %v885
      %v887 = vpop.f32.mrb[0].mxu0
      %888 = vmatprep.mubr.f32.mxu0 0.0
      %889 = vmatmul.mubr.f32.gmra.mrb[0].mxu0 %v796
      %v890 = vpop.f32.mrb[0].mxu0
      %v891 = vadd.f32 0.0, %v890
      %v892 = vpop.f32.mrb[0].mxu0
      %893 = vmatprep.mubr.f32.mxu0 0.0
      %894 = vmatmul.mubr.f32.gmra.mrb[0].mxu0 %v799
      %v895 = vpop.f32.mrb[0].mxu0
      %v896 = vadd.f32 0.0, %v895
      %v897 = vpop.f32.mrb[0].mxu0
      %898 = vdwg.mxu0
      %v900 = vsel %vm782, %v738, 0
      %v903 = vsel %vm782, %v739, 0
      %v906 = vsel %vm782, %v740, 0
      %v909 = vsel %vm782, %v741, 0
      %v912 = vsel %vm782, %v742, 0
      %v915 = vsel %vm782, %v743, 0
      %v918 = vsel %vm346, %v695, 0
      %920 = vmatprep.subr.mxu0 0.0
      %921 = vmatpush1.msra.mxu0 %v694
      %922 = vmatprep.subr.mxu0 0.0
      %923 = vmatpush1.msra.mxu0 %v918
      %924 = vmatprep.subr.mxu0 0.0
      %925 = vmatpush1.msra.mxu0 0.0
      %926 = vmatprep.subr.mxu0 0.0
      %927 = vmatpush1.msra.mxu0 0.0
      %928 = vmatprep.subr.mxu0 0.0
      %929 = vmatpush1.msra.mxu0 0.0
      %930 = vmatprep.subr.mxu0 0.0
      %931 = vmatpush1.msra.mxu0 0.0
      %932 = vmatprep.subr.mxu0 0.0
      %933 = vmatpush1.msra.mxu0 0.0
      %934 = vmatprep.subr.mxu0 0.0
      %935 = vmatpush1.msra.mxu0 0.0
      %936 = vmatprep.subr.mxu0 0.0
      %937 = vmatpush1.msra.mxu0 0.0
      %938 = vmatprep.subr.mxu0 0.0
      %939 = vmatpush1.msra.mxu0 0.0
      %940 = vmatprep.subr.mxu0 0.0
      %941 = vmatpush1.msra.mxu0 0.0
      %942 = vmatprep.subr.mxu0 0.0
      %943 = vmatpush1.msra.mxu0 0.0
      %944 = vmatprep.subr.mxu0 0.0
      %945 = vmatpush1.msra.mxu0 0.0
      %946 = vmatprep.subr.mxu0 0.0
      %947 = vmatpush1.msra.mxu0 0.0
      %948 = vmatprep.subr.mxu0 0.0
      %949 = vmatpush1.msra.mxu0 0.0
      %950 = vmatprep.subr.mxu0 0.0
      %951 = vmatpush1.msra.mxu0 0.0
      %952 = vmatprep.subr.mxu0 0.0
      %953 = vmatpush1.msra.mxu0 0.0
      %954 = vmatprep.subr.mxu0 0.0
      %955 = vmatpush1.msra.mxu0 0.0
      %956 = vmatprep.subr.mxu0 0.0
      %957 = vmatpush1.msra.mxu0 0.0
      %958 = vmatprep.subr.mxu0 0.0
      %959 = vmatpush1.msra.mxu0 0.0
      %960 = vmatprep.subr.mxu0 0.0
      %961 = vmatpush1.msra.mxu0 0.0
      %962 = vmatprep.subr.mxu0 0.0
      %963 = vmatpush1.msra.mxu0 0.0
      %964 = vmatprep.subr.mxu0 0.0
      %965 = vmatpush1.msra.mxu0 0.0
      %966 = vmatprep.subr.mxu0 0.0
      %967 = vmatpush1.msra.mxu0 0.0
      %968 = vmatprep.subr.mxu0 0.0
      %969 = vmatpush1.msra.mxu0 0.0
      %970 = vmatprep.subr.mxu0 0.0
      %971 = vmatpush1.msra.mxu0 0.0
      %972 = vmatprep.subr.mxu0 0.0
      %973 = vmatpush1.msra.mxu0 0.0
      %974 = vmatprep.subr.mxu0 0.0
      %975 = vmatpush1.msra.mxu0 0.0
      %976 = vmatprep.subr.mxu0 0.0
      %977 = vmatpush1.msra.mxu0 0.0
      %978 = vmatprep.subr.mxu0 0.0
      %979 = vmatpush1.msra.mxu0 0.0
      %980 = vmatprep.subr.mxu0 0.0
      %981 = vmatpush1.msra.mxu0 0.0
      %982 = vmatprep.subr.mxu0 0.0
      %983 = vmatpush1.msra.mxu0 0.0
      %984 = vmatprep.mubr.f32.mxu0 0.0
      %985 = vmatmul.mubr.f32.gmra.mrb[0].mxu0 %v900
      %v986 = vpop.f32.mrb[0].mxu0
      %v987 = vadd.f32 %v871, %v986
      %v988 = vpop.f32.mrb[0].mxu0
      %989 = vmatprep.mubr.f32.mxu0 0.0
      %990 = vmatmul.mubr.f32.gmra.mrb[0].mxu0 %v903
      %v991 = vpop.f32.mrb[0].mxu0
      %v992 = vadd.f32 %v876, %v991
      %v993 = vpop.f32.mrb[0].mxu0
      %994 = vmatprep.mubr.f32.mxu0 0.0
      %995 = vmatmul.mubr.f32.gmra.mrb[0].mxu0 %v906
      %v996 = vpop.f32.mrb[0].mxu0
      %v997 = vadd.f32 %v881, %v996
      %v998 = vpop.f32.mrb[0].mxu0
      %999 = vmatprep.mubr.f32.mxu0 0.0
      %1000 = vmatmul.mubr.f32.gmra.mrb[0].mxu0 %v909
      %v1001 = vpop.f32.mrb[0].mxu0
      %v1002 = vadd.f32 %v886, %v1001
      %v1003 = vpop.f32.mrb[0].mxu0
      %1004 = vmatprep.mubr.f32.mxu0 0.0
      %1005 = vmatmul.mubr.f32.gmra.mrb[0].mxu0 %v912
      %v1006 = vpop.f32.mrb[0].mxu0
      %v1007 = vadd.f32 %v891, %v1006
      %v1008 = vpop.f32.mrb[0].mxu0
      %1009 = vmatprep.mubr.f32.mxu0 0.0
      %1010 = vmatmul.mubr.f32.gmra.mrb[0].mxu0 %v915
      %v1011 = vpop.f32.mrb[0].mxu0
      %v1012 = vadd.f32 %v896, %v1011
      %v1013 = vpop.f32.mrb[0].mxu0
      %1014 = vdwg.mxu0
      %v1016 = vrot.slane %v679, 4
      %1017 = vrot.lane.b32.xlu0 %v1016, 112
      %v1018 = vpop.permute.xlu0 %1017
      %1020 = vrot.lane.b32.xlu0 %v679, 96
      %v1021 = vpop.permute.xlu0 %1020
      %1023 = vrot.lane.b32.xlu0 %v1016, 80
      %v1024 = vpop.permute.xlu0 %1023
      %1026 = vrot.lane.b32.xlu0 %v679, 64
      %v1027 = vpop.permute.xlu0 %1026
      %1029 = vrot.lane.b32.xlu0 %v1016, 48
      %v1030 = vpop.permute.xlu0 %1029
      %1032 = vrot.lane.b32.xlu0 %v679, 32
      %v1033 = vpop.permute.xlu0 %1032
      %1035 = vrot.lane.b32.xlu0 %v1016, 16
      %v1036 = vpop.permute.xlu0 %1035
      %v1039 = vrot.slane %v681, 4
      %1040 = vrot.lane.b32.xlu0 %v1039, 112
      %v1041 = vpop.permute.xlu0 %1040
      %1043 = vrot.lane.b32.xlu0 %v681, 96
      %v1044 = vpop.permute.xlu0 %1043
      %1046 = vrot.lane.b32.xlu0 %v1039, 80
      %v1047 = vpop.permute.xlu0 %1046
      %v1049 = vsel %vm346, %v679, %v1018
      %v1050 = vsel %vm346, %v1021, %v1024
      %v1051 = vsel %vm346, %v1027, %v1030
      %v1052 = vsel %vm346, %v1033, %v1036
      %v1053 = vsel %vm346, %v681, %v1041
      %v1054 = vsel %vm346, %v1044, %v1047
      %1056 = vrot.lane.b32.xlu0 %v679, 112
      %v1057 = vpop.permute.xlu0 %1056
      %1059 = vrot.lane.b32.xlu0 %v1016, 96
      %v1060 = vpop.permute.xlu0 %1059
      %1062 = vrot.lane.b32.xlu0 %v679, 80
      %v1063 = vpop.permute.xlu0 %1062
      %1065 = vrot.lane.b32.xlu0 %v1016, 64
      %v1066 = vpop.permute.xlu0 %1065
      %1068 = vrot.lane.b32.xlu0 %v679, 48
      %v1069 = vpop.permute.xlu0 %1068
      %1071 = vrot.lane.b32.xlu0 %v1016, 32
      %v1072 = vpop.permute.xlu0 %1071
      %1074 = vrot.lane.b32.xlu0 %v679, 16
      %v1075 = vpop.permute.xlu0 %1074
      %1078 = vrot.lane.b32.xlu0 %v681, 112
      %v1079 = vpop.permute.xlu0 %1078
      %1081 = vrot.lane.b32.xlu0 %v1039, 96
      %v1082 = vpop.permute.xlu0 %1081
      %1084 = vrot.lane.b32.xlu0 %v681, 80
      %v1085 = vpop.permute.xlu0 %1084
      %v1087 = vsel %vm346, %v1016, %v1057
      %v1088 = vsel %vm346, %v1060, %v1063
      %v1089 = vsel %vm346, %v1066, %v1069
      %v1090 = vsel %vm346, %v1072, %v1075
      %v1091 = vsel %vm346, %v1039, %v1079
      %v1092 = vsel %vm346, %v1082, %v1085
      %v1094 = vsel %vm782, %v1087, 0
      %v1097 = vsel %vm782, %v1088, 0
      %v1100 = vsel %vm782, %v1089, 0
      %v1103 = vsel %vm782, %v1090, 0
      %v1106 = vsel %vm782, %v1091, 0
      %v1109 = vsel %vm782, %v1092, 0
      %1111 = vmatprep.subr.mxu0 0.0
      %1112 = vmatpush1.msra.mxu0 %v702
      %1113 = vmatprep.subr.mxu0 0.0
      %1114 = vmatpush1.msra.mxu0 %v802
      %1115 = vmatprep.subr.mxu0 0.0
      %1116 = vmatpush1.msra.mxu0 0.0
      %1117 = vmatprep.subr.mxu0 0.0
      %1118 = vmatpush1.msra.mxu0 0.0
      %1119 = vmatprep.subr.mxu0 0.0
      %1120 = vmatpush1.msra.mxu0 0.0
      %1121 = vmatprep.subr.mxu0 0.0
      %1122 = vmatpush1.msra.mxu0 0.0
      %1123 = vmatprep.subr.mxu0 0.0
      %1124 = vmatpush1.msra.mxu0 0.0
      %1125 = vmatprep.subr.mxu0 0.0
      %1126 = vmatpush1.msra.mxu0 0.0
      %1127 = vmatprep.subr.mxu0 0.0
      %1128 = vmatpush1.msra.mxu0 0.0
      %1129 = vmatprep.subr.mxu0 0.0
      %1130 = vmatpush1.msra.mxu0 0.0
      %1131 = vmatprep.subr.mxu0 0.0
      %1132 = vmatpush1.msra.mxu0 0.0
      %1133 = vmatprep.subr.mxu0 0.0
      %1134 = vmatpush1.msra.mxu0 0.0
      %1135 = vmatprep.subr.mxu0 0.0
      %1136 = vmatpush1.msra.mxu0 0.0
      %1137 = vmatprep.subr.mxu0 0.0
      %1138 = vmatpush1.msra.mxu0 0.0
      %1139 = vmatprep.subr.mxu0 0.0
      %1140 = vmatpush1.msra.mxu0 0.0
      %1141 = vmatprep.subr.mxu0 0.0
      %1142 = vmatpush1.msra.mxu0 0.0
      %1143 = vmatprep.subr.mxu0 0.0
      %1144 = vmatpush1.msra.mxu0 0.0
      %1145 = vmatprep.subr.mxu0 0.0
      %1146 = vmatpush1.msra.mxu0 0.0
      %1147 = vmatprep.subr.mxu0 0.0
      %1148 = vmatpush1.msra.mxu0 0.0
      %1149 = vmatprep.subr.mxu0 0.0
      %1150 = vmatpush1.msra.mxu0 0.0
      %1151 = vmatprep.subr.mxu0 0.0
      %1152 = vmatpush1.msra.mxu0 0.0
      %1153 = vmatprep.subr.mxu0 0.0
      %1154 = vmatpush1.msra.mxu0 0.0
      %1155 = vmatprep.subr.mxu0 0.0
      %1156 = vmatpush1.msra.mxu0 0.0
      %1157 = vmatprep.subr.mxu0 0.0
      %1158 = vmatpush1.msra.mxu0 0.0
      %1159 = vmatprep.subr.mxu0 0.0
      %1160 = vmatpush1.msra.mxu0 0.0
      %1161 = vmatprep.subr.mxu0 0.0
      %1162 = vmatpush1.msra.mxu0 0.0
      %1163 = vmatprep.subr.mxu0 0.0
      %1164 = vmatpush1.msra.mxu0 0.0
      %1165 = vmatprep.subr.mxu0 0.0
      %1166 = vmatpush1.msra.mxu0 0.0
      %1167 = vmatprep.subr.mxu0 0.0
      %1168 = vmatpush1.msra.mxu0 0.0
      %1169 = vmatprep.subr.mxu0 0.0
      %1170 = vmatpush1.msra.mxu0 0.0
      %1171 = vmatprep.subr.mxu0 0.0
      %1172 = vmatpush1.msra.mxu0 0.0
      %1173 = vmatprep.subr.mxu0 0.0
      %1174 = vmatpush1.msra.mxu0 0.0
      %1175 = vmatprep.mubr.f32.mxu0 0.0
      %1176 = vmatmul.mubr.f32.gmra.mrb[0].mxu0 %v1094
      %v1177 = vpop.f32.mrb[0].mxu0
      %v1178 = vadd.f32 0.0, %v1177
      %v1179 = vpop.f32.mrb[0].mxu0
      %1180 = vmatprep.mubr.f32.mxu0 0.0
      %1181 = vmatmul.mubr.f32.gmra.mrb[0].mxu0 %v1097
      %v1182 = vpop.f32.mrb[0].mxu0
      %v1183 = vadd.f32 0.0, %v1182
      %v1184 = vpop.f32.mrb[0].mxu0
      %1185 = vmatprep.mubr.f32.mxu0 0.0
      %1186 = vmatmul.mubr.f32.gmra.mrb[0].mxu0 %v1100
      %v1187 = vpop.f32.mrb[0].mxu0
      %v1188 = vadd.f32 0.0, %v1187
      %v1189 = vpop.f32.mrb[0].mxu0
      %1190 = vmatprep.mubr.f32.mxu0 0.0
      %1191 = vmatmul.mubr.f32.gmra.mrb[0].mxu0 %v1103
      %v1192 = vpop.f32.mrb[0].mxu0
      %v1193 = vadd.f32 0.0, %v1192
      %v1194 = vpop.f32.mrb[0].mxu0
      %1195 = vmatprep.mubr.f32.mxu0 0.0
      %1196 = vmatmul.mubr.f32.gmra.mrb[0].mxu0 %v1106
      %v1197 = vpop.f32.mrb[0].mxu0
      %v1198 = vadd.f32 0.0, %v1197
      %v1199 = vpop.f32.mrb[0].mxu0
      %1200 = vmatprep.mubr.f32.mxu0 0.0
      %1201 = vmatmul.mubr.f32.gmra.mrb[0].mxu0 %v1109
      %v1202 = vpop.f32.mrb[0].mxu0
      %v1203 = vadd.f32 0.0, %v1202
      %v1204 = vpop.f32.mrb[0].mxu0
      %1205 = vdwg.mxu0
      %v1207 = vsel %vm782, %v1049, 0
      %v1210 = vsel %vm782, %v1050, 0
      %v1213 = vsel %vm782, %v1051, 0
      %v1216 = vsel %vm782, %v1052, 0
      %v1219 = vsel %vm782, %v1053, 0
      %v1222 = vsel %vm782, %v1054, 0
      %1224 = vmatprep.subr.mxu0 0.0
      %1225 = vmatpush1.msra.mxu0 %v694
      %1226 = vmatprep.subr.mxu0 0.0
      %1227 = vmatpush1.msra.mxu0 %v918
      %1228 = vmatprep.subr.mxu0 0.0
      %1229 = vmatpush1.msra.mxu0 0.0
      %1230 = vmatprep.subr.mxu0 0.0
      %1231 = vmatpush1.msra.mxu0 0.0
      %1232 = vmatprep.subr.mxu0 0.0
      %1233 = vmatpush1.msra.mxu0 0.0
      %1234 = vmatprep.subr.mxu0 0.0
      %1235 = vmatpush1.msra.mxu0 0.0
      %1236 = vmatprep.subr.mxu0 0.0
      %1237 = vmatpush1.msra.mxu0 0.0
      %1238 = vmatprep.subr.mxu0 0.0
      %1239 = vmatpush1.msra.mxu0 0.0
      %1240 = vmatprep.subr.mxu0 0.0
      %1241 = vmatpush1.msra.mxu0 0.0
      %1242 = vmatprep.subr.mxu0 0.0
      %1243 = vmatpush1.msra.mxu0 0.0
      %1244 = vmatprep.subr.mxu0 0.0
      %1245 = vmatpush1.msra.mxu0 0.0
      %1246 = vmatprep.subr.mxu0 0.0
      %1247 = vmatpush1.msra.mxu0 0.0
      %1248 = vmatprep.subr.mxu0 0.0
      %1249 = vmatpush1.msra.mxu0 0.0
      %1250 = vmatprep.subr.mxu0 0.0
      %1251 = vmatpush1.msra.mxu0 0.0
      %1252 = vmatprep.subr.mxu0 0.0
      %1253 = vmatpush1.msra.mxu0 0.0
      %1254 = vmatprep.subr.mxu0 0.0
      %1255 = vmatpush1.msra.mxu0 0.0
      %1256 = vmatprep.subr.mxu0 0.0
      %1257 = vmatpush1.msra.mxu0 0.0
      %1258 = vmatprep.subr.mxu0 0.0
      %1259 = vmatpush1.msra.mxu0 0.0
      %1260 = vmatprep.subr.mxu0 0.0
      %1261 = vmatpush1.msra.mxu0 0.0
      %1262 = vmatprep.subr.mxu0 0.0
      %1263 = vmatpush1.msra.mxu0 0.0
      %1264 = vmatprep.subr.mxu0 0.0
      %1265 = vmatpush1.msra.mxu0 0.0
      %1266 = vmatprep.subr.mxu0 0.0
      %1267 = vmatpush1.msra.mxu0 0.0
      %1268 = vmatprep.subr.mxu0 0.0
      %1269 = vmatpush1.msra.mxu0 0.0
      %1270 = vmatprep.subr.mxu0 0.0
      %1271 = vmatpush1.msra.mxu0 0.0
      %1272 = vmatprep.subr.mxu0 0.0
      %1273 = vmatpush1.msra.mxu0 0.0
      %1274 = vmatprep.subr.mxu0 0.0
      %1275 = vmatpush1.msra.mxu0 0.0
      %1276 = vmatprep.subr.mxu0 0.0
      %1277 = vmatpush1.msra.mxu0 0.0
      %1278 = vmatprep.subr.mxu0 0.0
      %1279 = vmatpush1.msra.mxu0 0.0
      %1280 = vmatprep.subr.mxu0 0.0
      %1281 = vmatpush1.msra.mxu0 0.0
      %1282 = vmatprep.subr.mxu0 0.0
      %1283 = vmatpush1.msra.mxu0 0.0
      %1284 = vmatprep.subr.mxu0 0.0
      %1285 = vmatpush1.msra.mxu0 0.0
      %1286 = vmatprep.subr.mxu0 0.0
      %1287 = vmatpush1.msra.mxu0 0.0
      %1288 = vmatprep.mubr.f32.mxu0 0.0
      %1289 = vmatmul.mubr.f32.gmra.mrb[0].mxu0 %v1207
      %v1290 = vpop.f32.mrb[0].mxu0
      %v1291 = vadd.f32 %v1178, %v1290
      %v1292 = vpop.f32.mrb[0].mxu0
      %1293 = vmatprep.mubr.f32.mxu0 0.0
      %1294 = vmatmul.mubr.f32.gmra.mrb[0].mxu0 %v1210
      %v1295 = vpop.f32.mrb[0].mxu0
      %v1296 = vadd.f32 %v1183, %v1295
      %v1297 = vpop.f32.mrb[0].mxu0
      %1298 = vmatprep.mubr.f32.mxu0 0.0
      %1299 = vmatmul.mubr.f32.gmra.mrb[0].mxu0 %v1213
      %v1300 = vpop.f32.mrb[0].mxu0
      %v1301 = vadd.f32 %v1188, %v1300
      %v1302 = vpop.f32.mrb[0].mxu0
      %1303 = vmatprep.mubr.f32.mxu0 0.0
      %1304 = vmatmul.mubr.f32.gmra.mrb[0].mxu0 %v1216
      %v1305 = vpop.f32.mrb[0].mxu0
      %v1306 = vadd.f32 %v1193, %v1305
      %v1307 = vpop.f32.mrb[0].mxu0
      %1308 = vmatprep.mubr.f32.mxu0 0.0
      %1309 = vmatmul.mubr.f32.gmra.mrb[0].mxu0 %v1219
      %v1310 = vpop.f32.mrb[0].mxu0
      %v1311 = vadd.f32 %v1198, %v1310
      %v1312 = vpop.f32.mrb[0].mxu0
      %1313 = vmatprep.mubr.f32.mxu0 0.0
      %1314 = vmatmul.mubr.f32.gmra.mrb[0].mxu0 %v1222
      %v1315 = vpop.f32.mrb[0].mxu0
      %v1316 = vadd.f32 %v1203, %v1315
      %v1317 = vpop.f32.mrb[0].mxu0
      %1318 = vdwg.mxu0
      %1320 = vrot.lane.b32.xlu0 %v1291, 24
      %v1321 = vpop.permute.xlu0 %1320
      %vm1323 = vcmask 195584
      %v1324 = vsel %vm1323, %v987, %v1321
      %vm1325 = vcmask 388096
      %1326 = vst.msk [vmem:[%s278] sm:$0xf] %vm1325, %v1324
      %v1328 = vcombine.high %v1324, %v1324
      %1329 = vrot.lane.b32.xlu0 %v1328, 48
      %v1330 = vpop.permute.xlu0 %1329
      %vm1332 = vcmask 781696
      %1333 = vst.msk [vmem:[%s278] sm:$0xf] %vm1332, %v1330
      %1335 = vrot.lane.b32.xlu0 %v1296, 24
      %v1336 = vpop.permute.xlu0 %1335
      %v1338 = vsel %vm1323, %v992, %v1336
      %1340 = vrot.lane.b32.xlu0 %v1338, 96
      %v1341 = vpop.permute.xlu0 %1340
      %v1342 = vrot.slane %v1341, 4
      %v1343 = vsel %vm328, %v1342, %v1341
      %vm1345 = vcmask 1044224
      %vm1346 = vcmask 130052
      %vm1347 = vmor %vm1346, %vm1345
      %1348 = vst.msk [vmem:[%s278] sm:$0xff] %vm1347, %v1343
      %v1349 = vcombine.high %v1338, %v1338
      %1350 = vrot.lane.b32.xlu0 %v1349, 16
      %v1351 = vpop.permute.xlu0 %1350
      %vm1353 = vcmask 519296
      %1354 = vst.msk [vmem:[%s278 + $0x4] sm:$0xf] %vm1353, %v1351
      %1356 = vrot.lane.b32.xlu0 %v1301, 24
      %v1357 = vpop.permute.xlu0 %1356
      %v1359 = vsel %vm1323, %v997, %v1357
      %1361 = vrot.lane.b32.xlu0 %v1359, 64
      %v1362 = vpop.permute.xlu0 %1361
      %vm1364 = vcmask 912896
      %1365 = vst.msk [vmem:[%s278 + $0x4] sm:$0xf] %vm1364, %v1362
      %v1366 = vcombine.high %v1359, %v1359
      %1367 = vrot.lane.b32.xlu0 %v1366, 112
      %v1368 = vpop.permute.xlu0 %1367
      %v1369 = vrot.slane %v1368, 4
      %v1370 = vsel %vm304, %v1369, %v1368
      %vm1372 = vcmask 1044352
      %vm1373 = vcmask 261124
      %vm1374 = vmor %vm1373, %vm1372
      %1375 = vst.msk [vmem:[%s278 + $0x4] sm:$0xff] %vm1374, %v1370
      %1377 = vrot.lane.b32.xlu0 %v1306, 24
      %v1378 = vpop.permute.xlu0 %1377
      %v1380 = vsel %vm1323, %v1002, %v1378
      %1382 = vrot.lane.b32.xlu0 %v1380, 32
      %v1383 = vpop.permute.xlu0 %1382
      %vm1385 = vcmask 650496
      %1386 = vst.msk [vmem:[%s278 + $0x8] sm:$0xf] %vm1385, %v1383
      %v1387 = vcombine.high %v1380, %v1380
      %1388 = vrot.lane.b32.xlu0 %v1387, 80
      %v1389 = vpop.permute.xlu0 %1388
      %vm1391 = vcmask 1044096
      %1392 = vst.msk [vmem:[%s278 + $0x8] sm:$0xf] %vm1391, %v1389
      %1394 = vrot.lane.b32.xlu0 %v1311, 24
      %v1395 = vpop.permute.xlu0 %1394
      %v1397 = vsel %vm1323, %v1007, %v1395
      %1398 = vst.msk [vmem:[%s278 + $0xc] sm:$0xf] %vm1325, %v1397
      %v1400 = vcombine.high %v1397, %v1397
      %1401 = vrot.lane.b32.xlu0 %v1400, 48
      %v1402 = vpop.permute.xlu0 %1401
      %1404 = vst.msk [vmem:[%s278 + $0xc] sm:$0xf] %vm1332, %v1402
      %1406 = vrot.lane.b32.xlu0 %v1316, 24
      %v1407 = vpop.permute.xlu0 %1406
      %v1409 = vsel %vm1323, %v1012, %v1407
      %1411 = vrot.lane.b32.xlu0 %v1409, 96
      %v1412 = vpop.permute.xlu0 %1411
      %v1413 = vrot.slane %v1412, 4
      %v1414 = vsel %vm328, %v1413, %v1412
      %1416 = vst.msk [vmem:[%s278 + $0xc] sm:$0xff] %vm1347, %v1414
      %v1417 = vcombine.high %v1409, %v1409
      %1418 = vrot.lane.b32.xlu0 %v1417, 16
      %v1419 = vpop.permute.xlu0 %1418
      %1421 = vst.msk [vmem:[%s278 + $0x10] sm:$0xf] %vm1353, %v1419
      %p1422 = scmp.lt.s32.totalorder %s18, 1
      %s1423 = scalar_select %p1422, %s18, 1
      %s1424 = smul.addr %s1423, 5
      %s1425 = smul.addr %s1424, 4
      %s1426 = scalar_lea.vmem %s7, %s1425
      // Predicated region
      $region49: #{decoder_block_2d.1} parent=47 // pred_check
        %p1427 = pneg %p188
      $region50: #{decoder_block_2d.1} parent=47 // pred_check_branch
        %1429 = sbr.rel (%p1427) target = $region52
      $region51: #{decoder_block_2d.1} parent=47 // pred_region
        _
      $region52: #{decoder_block_2d.1} parent=47 // pred_fallthru
        _
    $region48: #{decoder_block_2d.1} parent=5 // pred_fallthru
      _
    %p1430 = scmp.le.s32.totalorder 2, %s13
    // Predicated region
    $region53: #{decoder_block_2d.1} parent=5 // pred_check
      %p1431 = pneg %p1430
    $region54: #{decoder_block_2d.1} parent=5 // pred_check_branch
      %1433 = sbr.rel (%p1431) target = $region56
    $region55: #{decoder_block_2d.1} parent=5 // pred_region
      %s1434 = ssub.s32 %s13, 2
      // Predicated region
      $region57: #{decoder_block_2d.1} parent=55 // pred_check
        %p1435 = pneg %p194
      $region58: #{decoder_block_2d.1} parent=55 // pred_check_branch
        %1437 = sbr.rel (%p1435) target = $region60
      $region59: #{decoder_block_2d.1} parent=55 // pred_region
        %p1438 = scmp.lt.s32.totalorder %s19, 1
        %s1439 = scalar_select %p1438, %s19, 1
        %s1440 = smul.addr %s1439, 5
        %s1441 = smul.addr %s1440, 4
        %s1442 = scalar_lea.vmem %s7, %s1441
      $region60: #{decoder_block_2d.1} parent=55 // pred_fallthru
        _
    $region56: #{decoder_block_2d.1} parent=5 // pred_fallthru
      _
  $region6: #{decoder_block_2d.1} parent=0 // loop_footer
    %s17 = sadd.s32 1, %s13
  $region7: #{decoder_block_2d.1} parent=0 // loop_footer_branch
    %12 = sbr.rel target = $region3
  $region8: #{decoder_block_2d.1} parent=0 // loop_exit
    _

</llo_original>
